<compile_context>
chip_gen: v7x
topology: tpu7x:2x2x1
jax: 0.10.0
libtpu: 0.0.40
codegen_flags: <defaults>
</compile_context>

<pallas_src>
import functools

import jax
import jax.numpy as jnp
import numpy as np
from jax.experimental import pallas as pl
from jax.experimental.pallas import tpu as pltpu


# -----------------------------------------------------------------------------
# Kernel 1: time-parallel input projection
#   gx0[row, :] = (x[row] @ We + be) @ Wih[0],  row = t*Bp + b
# One well-shaped MXU matmul (M = MT rows) per grid tile; "parallel" axis.
# -----------------------------------------------------------------------------
def lstm_input_proj_kernel(x_ref, we_ref, wih0_ref, be_ref, gx_ref):
    emb = jnp.dot(x_ref[...].astype(jnp.bfloat16), we_ref[...],
                  preferred_element_type=jnp.float32) + be_ref[...]
    gx_ref[...] = jnp.dot(emb.astype(jnp.bfloat16), wih0_ref[...],
                          preferred_element_type=jnp.float32)


# -----------------------------------------------------------------------------
# Kernel 2: the recurrence.  grid = (T,), sequential ("arbitrary").
# Weights: constant index_map -> VMEM resident for the whole sequence.
# h/c: resident output blocks (constant index), initialized from h0/c0 at
# t == 0, written back to HBM once after the last step (aliased onto h0/c0).
# -----------------------------------------------------------------------------
def lstm_recurrent_kernel(gx_ref, wihr_ref, whh_ref, b_ref, h0_ref, c0_ref,
                          wo_ref, y_ref, h_ref, c_ref):
    n_layers, _, Hp = h0_ref.shape
    H4 = 4 * Hp
    t = pl.program_id(0)

    @pl.when(t == 0)
    def _():
        h_ref[...] = h0_ref[...]
        c_ref[...] = c0_ref[...]

    gx = gx_ref[...]                               # (Bp, 4Hp) f32, layer 0
    h_in = None
    for l in range(n_layers):                      # static -> unrolled
        if l > 0:
            gx = jnp.dot(h_in.astype(jnp.bfloat16), wihr_ref[l - 1],
                         preferred_element_type=jnp.float32)
        h_prev = h_ref[l]
        c_prev = c_ref[l]
        gates = gx + jnp.dot(h_prev.astype(jnp.bfloat16), whh_ref[l],
                             preferred_element_type=jnp.float32)
        gates = gates + b_ref[:, l * H4:(l + 1) * H4]
        # gates repacked as [i, f, o, g]: one sigmoid + one tanh per layer,
        # all slices on 128-lane boundaries.
        ifo = jax.nn.sigmoid(gates[:, :3 * Hp])
        g_g = jnp.tanh(gates[:, 3 * Hp:])
        c_new = ifo[:, Hp:2 * Hp] * c_prev + ifo[:, :Hp] * g_g
        h_new = ifo[:, 2 * Hp:] * jnp.tanh(c_new)
        h_ref[l] = h_new
        c_ref[l] = c_new
        h_in = h_new

    # output head: Linear(hidden -> output) + Tanh, lane-dense (Bp, Op) store
    y_ref[...] = jnp.tanh(
        jnp.dot(h_in.astype(jnp.bfloat16), wo_ref[...],
                preferred_element_type=jnp.float32)
        + b_ref[:, n_layers * H4:])


# -----------------------------------------------------------------------------
# Wrapper-side packing (done once per set of parameters)
# -----------------------------------------------------------------------------
def _rup(n, m):
    return ((n + m - 1) // m) * m


def _pad_dim(a, axis, new_size):
    pads = [(0, 0)] * a.ndim
    pads[axis] = (0, new_size - a.shape[axis])
    return jnp.pad(a, pads)


def _pack_gates(a, H, Hp):
    """PyTorch gate order [i,f,g,o] -> [i,f,o,g]; zero-pad each gate H -> Hp."""
    lead = a.shape[:-1]
    a = a.reshape(lead + (4, H))
    a = jnp.take(a, jnp.array([0, 1, 3, 2]), axis=-2)
    a = jnp.pad(a, [(0, 0)] * (a.ndim - 1) + [(0, Hp - H)])
    return a.reshape(lead + (4 * Hp,))


def pack_params(params):
    """Pad / reorder / fuse the module parameters into the kernel layout."""
    we, be, wih, whh, bih, bhh, h0, c0, wo, bo = params
    In, H = we.shape
    Out = wo.shape[1]
    L, B, _ = h0.shape
    Hp, Op, Bp = _rup(H, 128), _rup(Out, 128), _rup(B, 8)

    we_b = _pad_dim(we, 1, Hp).astype(jnp.bfloat16)                   # (In, Hp)
    be_p = _pad_dim(be, 1, Hp).astype(jnp.float32)                    # (1, Hp)

    wih_p = _pad_dim(_pack_gates(wih, H, Hp), 1, Hp)                  # (L, Hp, 4Hp)
    whh_b = _pad_dim(_pack_gates(whh, H, Hp), 1, Hp).astype(jnp.bfloat16)
    wih0_b = wih_p[0].astype(jnp.bfloat16)                            # (Hp, 4Hp)
    if L > 1:
        wihr_b = wih_p[1:].astype(jnp.bfloat16)                       # (L-1, Hp, 4Hp)
    else:
        # Dummy (never read when L == 1); keeps the kernel signature static.
        wihr_b = jnp.zeros((1, Hp, 4 * Hp), jnp.bfloat16)

    bl = _pack_gates(bih + bhh, H, Hp).reshape(1, -1)                 # (1, L*4Hp)
    bo_p = _pad_dim(bo, 1, Op)                                        # (1, Op)
    b_r = jnp.concatenate([bl, bo_p], axis=1).astype(jnp.float32)     # (1, L*4Hp+Op)

    wo_b = _pad_dim(_pad_dim(wo, 0, Hp), 1, Op).astype(jnp.bfloat16)  # (Hp, Op)

    h0_p = _pad_dim(_pad_dim(h0, 1, Bp), 2, Hp).astype(jnp.float32)   # (L, Bp, Hp)
    c0_p = _pad_dim(_pad_dim(c0, 1, Bp), 2, Hp).astype(jnp.float32)

    weights = (we_b, wih0_b, wihr_b, whh_b, b_r, be_p, wo_b)
    state = (h0_p, c0_p)
    dims = dict(input=In, hidden=H, output=Out, batch=B, layers=L)
    return weights, state, dims


def _vmem_limit(resident_bytes):
    """Generation-aware VMEM limit (v5e/v6e: 128 MiB physical, v7x: 64 MiB)."""
    try:
        cap = int(getattr(pltpu.get_tpu_info(), "vmem_capacity_bytes", 64 << 20))
    except Exception:
        cap = 64 << 20
    return int(max(16 << 20, min(2 * resident_bytes + (8 << 20), (3 * cap) // 4)))


# -----------------------------------------------------------------------------
# Forward over a sequence (T=1 == one module forward; state updated in place)
# -----------------------------------------------------------------------------
@functools.partial(jax.jit, donate_argnums=(1,))
def lstm_forward_seq(x_seq, state, weights):
    h0, c0 = state
    we_b, wih0_b, wihr_b, whh_b, b_r, be_p, wo_b = weights
    L, Bp, Hp = h0.shape
    In = we_b.shape[0]
    Op = wo_b.shape[1]
    H4 = 4 * Hp
    T, B, _ = x_seq.shape

    # Pad once per sequence (batch -> mult of 8; time -> mult of the row tile).
    TT = max(1, min(T, max(1, 512 // Bp)))
    nT = pl.cdiv(T, TT)
    Tpad = nT * TT
    MT = TT * Bp
    x_p = jnp.pad(x_seq, ((0, Tpad - T), (0, Bp - B), (0, 0))).astype(jnp.float32)
    x2 = x_p.reshape(Tpad * Bp, In)

    # ---- kernel 1: embed + layer-0 input projection, M = MT rows per tile ----
    proj_bytes = MT * (In + H4) * 4 + Hp * (In + H4) * 2 + Hp * 4
    gx0 = pl.pallas_call(
        lstm_input_proj_kernel,
        out_shape=jax.ShapeDtypeStruct((Tpad * Bp, H4), jnp.float32),
        grid=(nT,),
        in_specs=[
            pl.BlockSpec((MT, In), lambda i: (i, 0)),
            pl.BlockSpec((In, Hp), lambda i: (0, 0)),
            pl.BlockSpec((Hp, H4), lambda i: (0, 0)),
            pl.BlockSpec((1, Hp), lambda i: (0, 0)),
        ],
        out_specs=pl.BlockSpec((MT, H4), lambda i: (i, 0)),
        compiler_params=pltpu.CompilerParams(
            dimension_semantics=("parallel",),
            vmem_limit_bytes=_vmem_limit(proj_bytes),
        ),
    )(x2, we_b, wih0_b, be_p)

    # ---- kernel 2: the recurrence over T steps ----
    res_bytes = (2 * Bp * H4 * 4                       # gx0 block (double buf)
                 + wihr_b.size * 2 + whh_b.size * 2 + wo_b.size * 2
                 + b_r.size * 4
                 + 4 * L * Bp * Hp * 4                 # h0/c0 + h/c state
                 + 2 * Bp * Op * 4)                    # y block (double buf)
    y_p, h_new, c_new = pl.pallas_call(
        lstm_recurrent_kernel,
        out_shape=(
            jax.ShapeDtypeStruct((T * Bp, Op), jnp.float32),
            jax.ShapeDtypeStruct((L, Bp, Hp), jnp.float32),
            jax.ShapeDtypeStruct((L, Bp, Hp), jnp.float32),
        ),
        grid=(T,),
        in_specs=[
            pl.BlockSpec((Bp, H4), lambda t: (t, 0)),          # gx0, per step
            pl.BlockSpec(wihr_b.shape, lambda t: (0, 0, 0)),   # resident
            pl.BlockSpec(whh_b.shape, lambda t: (0, 0, 0)),    # resident
            pl.BlockSpec(b_r.shape, lambda t: (0, 0)),         # resident
            pl.BlockSpec((L, Bp, Hp), lambda t: (0, 0, 0)),    # h0
            pl.BlockSpec((L, Bp, Hp), lambda t: (0, 0, 0)),    # c0
            pl.BlockSpec(wo_b.shape, lambda t: (0, 0)),        # resident
        ],
        out_specs=(
            pl.BlockSpec((Bp, Op), lambda t: (t, 0)),          # y, per step
            pl.BlockSpec((L, Bp, Hp), lambda t: (0, 0, 0)),    # h state (resident)
            pl.BlockSpec((L, Bp, Hp), lambda t: (0, 0, 0)),    # c state (resident)
        ),
        input_output_aliases={4: 1, 5: 2},   # h0 -> h_new, c0 -> c_new in place
        compiler_params=pltpu.CompilerParams(
            dimension_semantics=("arbitrary",),
            vmem_limit_bytes=_vmem_limit(res_bytes),
        ),
    )(gx0, wihr_b, whh_b, b_r, h0, c0, wo_b)

    return y_p.reshape(T, Bp, Op), (h_new, c_new)


# -----------------------------------------------------------------------------
# Pure-JAX reference (mirrors the PyTorch module, stepped over a sequence)
# -----------------------------------------------------------------------------
def lstm_seq_ref(x_seq, params, bf16=False):
    """bf16=True mirrors the kernel's quantization (bf16 weights / matmul
    inputs, f32 accumulation); bf16=False is the exact f32 module math."""
    we, be, wih, whh, bih, bhh, h, c, wo, bo = params
    q = (lambda a: a.astype(jnp.bfloat16).astype(jnp.float32)) if bf16 else (lambda a: a)
    we, wih, whh, wo = q(we), q(wih), q(whh), q(wo)
    L, H = h.shape[0], h.shape[-1]
    ys = []
    for t in range(x_seq.shape[0]):
        h_in = q(x_seq[t]) @ we + be
        new_h, new_c = [], []
        for l in range(L):
            gates = q(h_in) @ wih[l] + bih[l] + q(h[l]) @ whh[l] + bhh[l]
            i_g = jax.nn.sigmoid(gates[:, 0 * H:1 * H])
            f_g = jax.nn.sigmoid(gates[:, 1 * H:2 * H])
            g_g = jnp.tanh(gates[:, 2 * H:3 * H])
            o_g = jax.nn.sigmoid(gates[:, 3 * H:4 * H])
            c_new = f_g * c[l] + i_g * g_g
            h_new = o_g * jnp.tanh(c_new)
            new_h.append(h_new)
            new_c.append(c_new)
            h_in = h_new
        h, c = jnp.stack(new_h), jnp.stack(new_c)
        ys.append(jnp.tanh(q(h_in) @ wo + bo))
    return jnp.stack(ys), h, c


def init_params(key, input_size, output_size, hidden_size, n_layers, batch_size):
    """Deterministic synthetic parameters (shapes match the nn.Module,
    weights pre-transposed to (in_features, out_features))."""
    ks = jax.random.split(key, 8)
    s = 0.1
    we = s * jax.random.normal(ks[0], (input_size, hidden_size), jnp.float32)
    be = s * jax.random.normal(ks[1], (1, hidden_size), jnp.float32)
    wih = s * jax.random.normal(ks[2], (n_layers, hidden_size, 4 * hidden_size), jnp.float32)
    whh = s * jax.random.normal(ks[3], (n_layers, hidden_size, 4 * hidden_size), jnp.float32)
    bih = s * jax.random.normal(ks[4], (n_layers, 1, 4 * hidden_size), jnp.float32)
    bhh = s * jax.random.normal(ks[5], (n_layers, 1, 4 * hidden_size), jnp.float32)
    h0 = jnp.zeros((n_layers, batch_size, hidden_size), jnp.float32)   # init_hidden()
    c0 = jnp.zeros((n_layers, batch_size, hidden_size), jnp.float32)
    wo = s * jax.random.normal(ks[6], (hidden_size, output_size), jnp.float32)
    bo = s * jax.random.normal(ks[7], (1, output_size), jnp.float32)
    return (we, be, wih, whh, bih, bhh, h0, c0, wo, bo)


if __name__ == "__main__":
    input_size, output_size, hidden_size = 16, 16, 64
    n_layers, batch_size = 2, 8
    T1, T2 = 8, 1          # a multi-step sequence, then a single module-style step

    key = jax.random.PRNGKey(0)
    pkey, k1, k2 = jax.random.split(key, 3)
    params = init_params(pkey, input_size, output_size,
                         hidden_size, n_layers, batch_size)
    weights, state, dims = pack_params(params)

    x1 = jax.random.normal(k1, (T1, batch_size, input_size), jnp.float32)
    x2 = jax.random.normal(k2, (T2, batch_size, input_size), jnp.float32)

    y1_p, state = lstm_forward_seq(x1, state, weights)   # state starts at zeros
    y2_p, state = lstm_forward_seq(x2, state, weights)   # recurrent path, T=1
    jax.block_until_ready((y1_p, y2_p, state))

    B, H, Out = dims["batch"], dims["hidden"], dims["output"]
    y = np.concatenate([np.asarray(y1_p), np.asarray(y2_p)], axis=0)[:, :B, :Out]
    h = np.asarray(state[0])[:, :B, :H]
    c = np.asarray(state[1])[:, :B, :H]

    x_all = jnp.concatenate([x1, x2], axis=0)

    # Structural check: reference mirroring the kernel's bf16 matmul operands.
    y_q, h_q, c_q = lstm_seq_ref(x_all, params, bf16=True)
    np.testing.assert_allclose(y, np.asarray(y_q), rtol=3e-2, atol=3e-3)
    np.testing.assert_allclose(h, np.asarray(h_q), rtol=3e-2, atol=3e-3)
    np.testing.assert_allclose(c, np.asarray(c_q), rtol=3e-2, atol=3e-3)

    # Module-fidelity check: exact f32 math (difference is only the intended
    # bf16 weight/activation-input quantization).
    y_r, h_r, c_r = lstm_seq_ref(x_all, params, bf16=False)
    np.testing.assert_allclose(y, np.asarray(y_r), rtol=5e-2, atol=5e-2)
    np.testing.assert_allclose(h, np.asarray(h_r), rtol=5e-2, atol=5e-2)
    np.testing.assert_allclose(c, np.asarray(c_r), rtol=5e-2, atol=5e-2)

    print("KERNEL_OK")
</pallas_src>

<mosaic_0001>
module attributes {stable_mosaic.version = 11 : i64} {
  func.func @lstm_input_proj_kernel(%arg0: i32, %arg1: memref<64x16xf32, #tpu.memory_space<vmem>>, %arg2: memref<16x128xbf16, #tpu.memory_space<vmem>>, %arg3: memref<128x512xbf16, #tpu.memory_space<vmem>>, %arg4: memref<1x128xf32, #tpu.memory_space<vmem>>, %arg5: memref<64x512xf32, #tpu.memory_space<vmem>>) attributes {dimension_semantics = [#tpu.dimension_semantics<parallel>], iteration_bounds = array<i64: 1>, scalar_prefetch = 0 : i64, scratch_operands = 0 : i64, tpu.core_type = #tpu.core_type<tc>, window_params = [{transform_indices = @transform_0, window_bounds = array<i64: 64, 16>}, {pipeline_mode = #tpu.pipeline_mode<synchronous>, transform_indices = @transform_1, window_bounds = array<i64: 16, 128>}, {pipeline_mode = #tpu.pipeline_mode<synchronous>, transform_indices = @transform_2, window_bounds = array<i64: 128, 512>}, {pipeline_mode = #tpu.pipeline_mode<synchronous>, transform_indices = @transform_3, window_bounds = array<i64: 1, 128>}, {transform_indices = @transform_4, window_bounds = array<i64: 64, 512>}]} {
    %c0 = arith.constant 0 : index
    %c0_0 = arith.constant 0 : index
    %0 = vector.load %arg1[%c0, %c0_0] : memref<64x16xf32, #tpu.memory_space<vmem>>, vector<64x16xf32>
    %1 = arith.truncf %0 : vector<64x16xf32> to vector<64x16xbf16>
    %c0_1 = arith.constant 0 : index
    %c0_2 = arith.constant 0 : index
    %2 = vector.load %arg2[%c0_1, %c0_2] : memref<16x128xbf16, #tpu.memory_space<vmem>>, vector<16x128xbf16>
    %cst = arith.constant dense<0.000000e+00> : vector<64x128xf32>
    %3 = tpu.matmul %1, %2, %cst {dimension_numbers = #tpu.dot_dimension_numbers<[1], [0], [0], [1], [0, 0, 1, 1], [], []>} : vector<64x16xbf16>, vector<16x128xbf16>, vector<64x128xf32> -> vector<64x128xf32>
    %c0_3 = arith.constant 0 : index
    %c0_4 = arith.constant 0 : index
    %4 = vector.load %arg4[%c0_3, %c0_4] : memref<1x128xf32, #tpu.memory_space<vmem>>, vector<1x128xf32>
    %5 = vector.broadcast %4 : vector<1x128xf32> to vector<64x128xf32>
    %6 = arith.addf %3, %5 : vector<64x128xf32>
    %7 = arith.truncf %6 : vector<64x128xf32> to vector<64x128xbf16>
    %c0_5 = arith.constant 0 : index
    %c0_6 = arith.constant 0 : index
    %8 = vector.load %arg3[%c0_5, %c0_6] : memref<128x512xbf16, #tpu.memory_space<vmem>>, vector<128x512xbf16>
    %cst_7 = arith.constant dense<0.000000e+00> : vector<64x512xf32>
    %9 = tpu.matmul %7, %8, %cst_7 {dimension_numbers = #tpu.dot_dimension_numbers<[1], [0], [0], [1], [0, 0, 1, 1], [], []>} : vector<64x128xbf16>, vector<128x512xbf16>, vector<64x512xf32> -> vector<64x512xf32>
    %c0_8 = arith.constant 0 : index
    %c0_9 = arith.constant 0 : index
    %10 = vector.load %arg5[%c0_8, %c0_9] : memref<64x512xf32, #tpu.memory_space<vmem>>, vector<64x512xf32>
    tpu.vector_store %arg5[%c0_8, %c0_9], %9 {strides = array<i32>} : memref<64x512xf32, #tpu.memory_space<vmem>>, vector<64x512xf32>,
    return
  }
  func.func @transform_0(%arg0: i32) -> (i32, i32) {
    %c0_i32 = arith.constant 0 : i32
    %c0_i32_0 = arith.constant 0 : i32
    return %arg0, %c0_i32 : i32, i32
  }
  func.func @transform_1(%arg0: i32) -> (i32, i32) {
    %c0_i32 = arith.constant 0 : i32
    %c0_i32_0 = arith.constant 0 : i32
    %c0_i32_1 = arith.constant 0 : i32
    return %c0_i32, %c0_i32_0 : i32, i32
  }
  func.func @transform_2(%arg0: i32) -> (i32, i32) {
    %c0_i32 = arith.constant 0 : i32
    %c0_i32_0 = arith.constant 0 : i32
    %c0_i32_1 = arith.constant 0 : i32
    return %c0_i32, %c0_i32_0 : i32, i32
  }
  func.func @transform_3(%arg0: i32) -> (i32, i32) {
    %c0_i32 = arith.constant 0 : i32
    %c0_i32_0 = arith.constant 0 : i32
    %c0_i32_1 = arith.constant 0 : i32
    return %c0_i32, %c0_i32_0 : i32, i32
  }
  func.func @transform_4(%arg0: i32) -> (i32, i32) {
    %c0_i32 = arith.constant 0 : i32
    %c0_i32_0 = arith.constant 0 : i32
    return %arg0, %c0_i32 : i32, i32
  }
}

module attributes {stable_mosaic.version = 11 : i64} {
  func.func @lstm_recurrent_kernel(%arg0: i32, %arg1: memref<8x512xf32, #tpu.memory_space<vmem>>, %arg2: memref<1x128x512xbf16, #tpu.memory_space<vmem>>, %arg3: memref<2x128x512xbf16, #tpu.memory_space<vmem>>, %arg4: memref<1x1152xf32, #tpu.memory_space<vmem>>, %arg5: memref<2x8x128xf32, #tpu.memory_space<vmem>>, %arg6: memref<2x8x128xf32, #tpu.memory_space<vmem>>, %arg7: memref<128x128xbf16, #tpu.memory_space<vmem>>, %arg8: memref<8x128xf32, #tpu.memory_space<vmem>>, %arg9: memref<2x8x128xf32, #tpu.memory_space<vmem>>, %arg10: memref<2x8x128xf32, #tpu.memory_space<vmem>>) attributes {dimension_semantics = [#tpu.dimension_semantics<arbitrary>], iteration_bounds = array<i64: 8>, scalar_prefetch = 0 : i64, scratch_operands = 0 : i64, tpu.core_type = #tpu.core_type<tc>, window_params = [{transform_indices = @transform_0, window_bounds = array<i64: 8, 512>}, {pipeline_mode = #tpu.pipeline_mode<synchronous>, transform_indices = @transform_1, window_bounds = array<i64: 1, 128, 512>}, {pipeline_mode = #tpu.pipeline_mode<synchronous>, transform_indices = @transform_2, window_bounds = array<i64: 2, 128, 512>}, {pipeline_mode = #tpu.pipeline_mode<synchronous>, transform_indices = @transform_3, window_bounds = array<i64: 1, 1152>}, {pipeline_mode = #tpu.pipeline_mode<synchronous>, transform_indices = @transform_4, window_bounds = array<i64: 2, 8, 128>}, {pipeline_mode = #tpu.pipeline_mode<synchronous>, transform_indices = @transform_5, window_bounds = array<i64: 2, 8, 128>}, {pipeline_mode = #tpu.pipeline_mode<synchronous>, transform_indices = @transform_6, window_bounds = array<i64: 128, 128>}, {transform_indices = @transform_7, window_bounds = array<i64: 8, 128>}, {pipeline_mode = #tpu.pipeline_mode<synchronous>, transform_indices = @transform_8, window_bounds = array<i64: 2, 8, 128>}, {pipeline_mode = #tpu.pipeline_mode<synchronous>, transform_indices = @transform_9, window_bounds = array<i64: 2, 8, 128>}]} {
    %c0_i32 = arith.constant 0 : i32
    %0 = arith.cmpi eq, %arg0, %c0_i32 : i32
    %1 = arith.extui %0 : i1 to i32
    %c0_i32_0 = arith.constant 0 : i32
    %2 = arith.cmpi ne, %1, %c0_i32_0 : i32
    scf.if %2 {
      %c0_47 = arith.constant 0 : index
      %c0_48 = arith.constant 0 : index
      %c0_49 = arith.constant 0 : index
      %84 = vector.load %arg5[%c0_47, %c0_48, %c0_49] : memref<2x8x128xf32, #tpu.memory_space<vmem>>, vector<2x8x128xf32>
      %c0_50 = arith.constant 0 : index
      %c0_51 = arith.constant 0 : index
      %c0_52 = arith.constant 0 : index
      %85 = vector.load %arg9[%c0_50, %c0_51, %c0_52] : memref<2x8x128xf32, #tpu.memory_space<vmem>>, vector<2x8x128xf32>
      tpu.vector_store %arg9[%c0_50, %c0_51, %c0_52], %84 {strides = array<i32>} : memref<2x8x128xf32, #tpu.memory_space<vmem>>, vector<2x8x128xf32>,
      %c0_53 = arith.constant 0 : index
      %c0_54 = arith.constant 0 : index
      %c0_55 = arith.constant 0 : index
      %86 = vector.load %arg6[%c0_53, %c0_54, %c0_55] : memref<2x8x128xf32, #tpu.memory_space<vmem>>, vector<2x8x128xf32>
      %c0_56 = arith.constant 0 : index
      %c0_57 = arith.constant 0 : index
      %c0_58 = arith.constant 0 : index
      %87 = vector.load %arg10[%c0_56, %c0_57, %c0_58] : memref<2x8x128xf32, #tpu.memory_space<vmem>>, vector<2x8x128xf32>
      tpu.vector_store %arg10[%c0_56, %c0_57, %c0_58], %86 {strides = array<i32>} : memref<2x8x128xf32, #tpu.memory_space<vmem>>, vector<2x8x128xf32>,
    } else {
    }
    %c0 = arith.constant 0 : index
    %c0_1 = arith.constant 0 : index
    %3 = vector.load %arg1[%c0, %c0_1] : memref<8x512xf32, #tpu.memory_space<vmem>>, vector<8x512xf32>
    %c0_2 = arith.constant 0 : index
    %c0_3 = arith.constant 0 : index
    %c0_4 = arith.constant 0 : index
    %4 = vector.load %arg9[%c0_2, %c0_3, %c0_4] : memref<2x8x128xf32, #tpu.memory_space<vmem>>, vector<1x8x128xf32>
    %5 = vector.shape_cast %4 : vector<1x8x128xf32> to vector<8x128xf32>
    %c0_5 = arith.constant 0 : index
    %c0_6 = arith.constant 0 : index
    %c0_7 = arith.constant 0 : index
    %6 = vector.load %arg10[%c0_5, %c0_6, %c0_7] : memref<2x8x128xf32, #tpu.memory_space<vmem>>, vector<1x8x128xf32>
    %7 = vector.shape_cast %6 : vector<1x8x128xf32> to vector<8x128xf32>
    %8 = arith.truncf %5 : vector<8x128xf32> to vector<8x128xbf16>
    %c0_8 = arith.constant 0 : index
    %c0_9 = arith.constant 0 : index
    %c0_10 = arith.constant 0 : index
    %9 = vector.load %arg3[%c0_8, %c0_9, %c0_10] : memref<2x128x512xbf16, #tpu.memory_space<vmem>>, vector<1x128x512xbf16>
    %10 = vector.shape_cast %9 : vector<1x128x512xbf16> to vector<128x512xbf16>
    %cst = arith.constant dense<0.000000e+00> : vector<8x512xf32>
    %11 = tpu.matmul %8, %10, %cst {dimension_numbers = #tpu.dot_dimension_numbers<[1], [0], [0], [1], [0, 0, 1, 1], [], []>} : vector<8x128xbf16>, vector<128x512xbf16>, vector<8x512xf32> -> vector<8x512xf32>
    %12 = arith.addf %3, %11 : vector<8x512xf32>
    %c0_11 = arith.constant 0 : index
    %c0_12 = arith.constant 0 : index
    %13 = vector.load %arg4[%c0_11, %c0_12] : memref<1x1152xf32, #tpu.memory_space<vmem>>, vector<1x512xf32>
    %14 = vector.broadcast %13 : vector<1x512xf32> to vector<8x512xf32>
    %15 = arith.addf %12, %14 : vector<8x512xf32>
    %16 = vector.extract_strided_slice %15 {offsets = [0, 0], sizes = [8, 384], strides = [1, 1]} : vector<8x512xf32> to vector<8x384xf32>
    %17 = arith.negf %16 : vector<8x384xf32>
    %18 = math.exp %17 : vector<8x384xf32>
    %cst_13 = arith.constant 1.000000e+00 : f32
    %19 = vector.broadcast %cst_13 : f32 to vector<8x384xf32>
    %20 = arith.addf %19, %18 : vector<8x384xf32>
    %21 = arith.divf %19, %20 : vector<8x384xf32>
    %22 = vector.extract_strided_slice %15 {offsets = [0, 384], sizes = [8, 128], strides = [1, 1]} : vector<8x512xf32> to vector<8x128xf32>
    %23 = math.tanh %22 : vector<8x128xf32>
    %24 = vector.extract_strided_slice %21 {offsets = [0, 128], sizes = [8, 128], strides = [1, 1]} : vector<8x384xf32> to vector<8x128xf32>
    %25 = arith.mulf %24, %7 : vector<8x128xf32>
    %26 = vector.extract_strided_slice %21 {offsets = [0, 0], sizes = [8, 128], strides = [1, 1]} : vector<8x384xf32> to vector<8x128xf32>
    %27 = arith.mulf %26, %23 : vector<8x128xf32>
    %28 = arith.addf %25, %27 : vector<8x128xf32>
    %29 = vector.extract_strided_slice %21 {offsets = [0, 256], sizes = [8, 128], strides = [1, 1]} : vector<8x384xf32> to vector<8x128xf32>
    %30 = math.tanh %28 : vector<8x128xf32>
    %31 = arith.mulf %29, %30 : vector<8x128xf32>
    %c0_14 = arith.constant 0 : index
    %c0_15 = arith.constant 0 : index
    %c0_16 = arith.constant 0 : index
    %32 = vector.load %arg9[%c0_14, %c0_15, %c0_16] : memref<2x8x128xf32, #tpu.memory_space<vmem>>, vector<1x8x128xf32>
    %33 = vector.shape_cast %32 : vector<1x8x128xf32> to vector<8x128xf32>
    %34 = vector.shape_cast %31 : vector<8x128xf32> to vector<1x8x128xf32>
    tpu.vector_store %arg9[%c0_14, %c0_15, %c0_16], %34 {strides = array<i32>} : memref<2x8x128xf32, #tpu.memory_space<vmem>>, vector<1x8x128xf32>,
    %c0_17 = arith.constant 0 : index
    %c0_18 = arith.constant 0 : index
    %c0_19 = arith.constant 0 : index
    %35 = vector.load %arg10[%c0_17, %c0_18, %c0_19] : memref<2x8x128xf32, #tpu.memory_space<vmem>>, vector<1x8x128xf32>
    %36 = vector.shape_cast %35 : vector<1x8x128xf32> to vector<8x128xf32>
    %37 = vector.shape_cast %28 : vector<8x128xf32> to vector<1x8x128xf32>
    tpu.vector_store %arg10[%c0_17, %c0_18, %c0_19], %37 {strides = array<i32>} : memref<2x8x128xf32, #tpu.memory_space<vmem>>, vector<1x8x128xf32>,
    %38 = arith.truncf %31 : vector<8x128xf32> to vector<8x128xbf16>
    %c0_20 = arith.constant 0 : index
    %c0_21 = arith.constant 0 : index
    %c0_22 = arith.constant 0 : index
    %39 = vector.load %arg2[%c0_20, %c0_21, %c0_22] : memref<1x128x512xbf16, #tpu.memory_space<vmem>>, vector<1x128x512xbf16>
    %40 = vector.shape_cast %39 : vector<1x128x512xbf16> to vector<128x512xbf16>
    %cst_23 = arith.constant dense<0.000000e+00> : vector<8x512xf32>
    %41 = tpu.matmul %38, %40, %cst_23 {dimension_numbers = #tpu.dot_dimension_numbers<[1], [0], [0], [1], [0, 0, 1, 1], [], []>} : vector<8x128xbf16>, vector<128x512xbf16>, vector<8x512xf32> -> vector<8x512xf32>
    %c1 = arith.constant 1 : index
    %c0_24 = arith.constant 0 : index
    %c0_25 = arith.constant 0 : index
    %42 = vector.load %arg9[%c1, %c0_24, %c0_25] : memref<2x8x128xf32, #tpu.memory_space<vmem>>, vector<1x8x128xf32>
    %43 = vector.shape_cast %42 : vector<1x8x128xf32> to vector<8x128xf32>
    %c1_26 = arith.constant 1 : index
    %c0_27 = arith.constant 0 : index
    %c0_28 = arith.constant 0 : index
    %44 = vector.load %arg10[%c1_26, %c0_27, %c0_28] : memref<2x8x128xf32, #tpu.memory_space<vmem>>, vector<1x8x128xf32>
    %45 = vector.shape_cast %44 : vector<1x8x128xf32> to vector<8x128xf32>
    %46 = arith.truncf %43 : vector<8x128xf32> to vector<8x128xbf16>
    %c1_29 = arith.constant 1 : index
    %c0_30 = arith.constant 0 : index
    %c0_31 = arith.constant 0 : index
    %47 = vector.load %arg3[%c1_29, %c0_30, %c0_31] : memref<2x128x512xbf16, #tpu.memory_space<vmem>>, vector<1x128x512xbf16>
    %48 = vector.shape_cast %47 : vector<1x128x512xbf16> to vector<128x512xbf16>
    %cst_32 = arith.constant dense<0.000000e+00> : vector<8x512xf32>
    %49 = tpu.matmul %46, %48, %cst_32 {dimension_numbers = #tpu.dot_dimension_numbers<[1], [0], [0], [1], [0, 0, 1, 1], [], []>} : vector<8x128xbf16>, vector<128x512xbf16>, vector<8x512xf32> -> vector<8x512xf32>
    %50 = arith.addf %41, %49 : vector<8x512xf32>
    %c0_33 = arith.constant 0 : index
    %c512 = arith.constant 512 : index
    %51 = vector.load %arg4[%c0_33, %c512] : memref<1x1152xf32, #tpu.memory_space<vmem>>, vector<1x512xf32>
    %52 = vector.broadcast %51 : vector<1x512xf32> to vector<8x512xf32>
    %53 = arith.addf %50, %52 : vector<8x512xf32>
    %54 = vector.extract_strided_slice %53 {offsets = [0, 0], sizes = [8, 384], strides = [1, 1]} : vector<8x512xf32> to vector<8x384xf32>
    %55 = arith.negf %54 : vector<8x384xf32>
    %56 = math.exp %55 : vector<8x384xf32>
    %cst_34 = arith.constant 1.000000e+00 : f32
    %57 = vector.broadcast %cst_34 : f32 to vector<8x384xf32>
    %58 = arith.addf %57, %56 : vector<8x384xf32>
    %59 = arith.divf %57, %58 : vector<8x384xf32>
    %60 = vector.extract_strided_slice %53 {offsets = [0, 384], sizes = [8, 128], strides = [1, 1]} : vector<8x512xf32> to vector<8x128xf32>
    %61 = math.tanh %60 : vector<8x128xf32>
    %62 = vector.extract_strided_slice %59 {offsets = [0, 128], sizes = [8, 128], strides = [1, 1]} : vector<8x384xf32> to vector<8x128xf32>
    %63 = arith.mulf %62, %45 : vector<8x128xf32>
    %64 = vector.extract_strided_slice %59 {offsets = [0, 0], sizes = [8, 128], strides = [1, 1]} : vector<8x384xf32> to vector<8x128xf32>
    %65 = arith.mulf %64, %61 : vector<8x128xf32>
    %66 = arith.addf %63, %65 : vector<8x128xf32>
    %67 = vector.extract_strided_slice %59 {offsets = [0, 256], sizes = [8, 128], strides = [1, 1]} : vector<8x384xf32> to vector<8x128xf32>
    %68 = math.tanh %66 : vector<8x128xf32>
    %69 = arith.mulf %67, %68 : vector<8x128xf32>
    %c1_35 = arith.constant 1 : index
    %c0_36 = arith.constant 0 : index
    %c0_37 = arith.constant 0 : index
    %70 = vector.load %arg9[%c1_35, %c0_36, %c0_37] : memref<2x8x128xf32, #tpu.memory_space<vmem>>, vector<1x8x128xf32>
    %71 = vector.shape_cast %70 : vector<1x8x128xf32> to vector<8x128xf32>
    %72 = vector.shape_cast %69 : vector<8x128xf32> to vector<1x8x128xf32>
    tpu.vector_store %arg9[%c1_35, %c0_36, %c0_37], %72 {strides = array<i32>} : memref<2x8x128xf32, #tpu.memory_space<vmem>>, vector<1x8x128xf32>,
    %c1_38 = arith.constant 1 : index
    %c0_39 = arith.constant 0 : index
    %c0_40 = arith.constant 0 : index
    %73 = vector.load %arg10[%c1_38, %c0_39, %c0_40] : memref<2x8x128xf32, #tpu.memory_space<vmem>>, vector<1x8x128xf32>
    %74 = vector.shape_cast %73 : vector<1x8x128xf32> to vector<8x128xf32>
    %75 = vector.shape_cast %66 : vector<8x128xf32> to vector<1x8x128xf32>
    tpu.vector_store %arg10[%c1_38, %c0_39, %c0_40], %75 {strides = array<i32>} : memref<2x8x128xf32, #tpu.memory_space<vmem>>, vector<1x8x128xf32>,
    %76 = arith.truncf %69 : vector<8x128xf32> to vector<8x128xbf16>
    %c0_41 = arith.constant 0 : index
    %c0_42 = arith.constant 0 : index
    %77 = vector.load %arg7[%c0_41, %c0_42] : memref<128x128xbf16, #tpu.memory_space<vmem>>, vector<128x128xbf16>
    %cst_43 = arith.constant dense<0.000000e+00> : vector<8x128xf32>
    %78 = tpu.matmul %76, %77, %cst_43 {dimension_numbers = #tpu.dot_dimension_numbers<[1], [0], [0], [1], [0, 0, 1, 1], [], []>} : vector<8x128xbf16>, vector<128x128xbf16>, vector<8x128xf32> -> vector<8x128xf32>
    %c0_44 = arith.constant 0 : index
    %c1024 = arith.constant 1024 : index
    %79 = vector.load %arg4[%c0_44, %c1024] : memref<1x1152xf32, #tpu.memory_space<vmem>>, vector<1x128xf32>
    %80 = vector.broadcast %79 : vector<1x128xf32> to vector<8x128xf32>
    %81 = arith.addf %78, %80 : vector<8x128xf32>
    %82 = math.tanh %81 : vector<8x128xf32>
    %c0_45 = arith.constant 0 : index
    %c0_46 = arith.constant 0 : index
    %83 = vector.load %arg8[%c0_45, %c0_46] : memref<8x128xf32, #tpu.memory_space<vmem>>, vector<8x128xf32>
    tpu.vector_store %arg8[%c0_45, %c0_46], %82 {strides = array<i32>} : memref<8x128xf32, #tpu.memory_space<vmem>>, vector<8x128xf32>,
    return
  }
  func.func @transform_0(%arg0: i32) -> (i32, i32) {
    %c0_i32 = arith.constant 0 : i32
    %c0_i32_0 = arith.constant 0 : i32
    return %arg0, %c0_i32 : i32, i32
  }
  func.func @transform_1(%arg0: i32) -> (i32, i32, i32) {
    %c0_i32 = arith.constant 0 : i32
    %c0_i32_0 = arith.constant 0 : i32
    %c0_i32_1 = arith.constant 0 : i32
    %c0_i32_2 = arith.constant 0 : i32
    return %c0_i32, %c0_i32_0, %c0_i32_1 : i32, i32, i32
  }
  func.func @transform_2(%arg0: i32) -> (i32, i32, i32) {
    %c0_i32 = arith.constant 0 : i32
    %c0_i32_0 = arith.constant 0 : i32
    %c0_i32_1 = arith.constant 0 : i32
    %c0_i32_2 = arith.constant 0 : i32
    return %c0_i32, %c0_i32_0, %c0_i32_1 : i32, i32, i32
  }
  func.func @transform_3(%arg0: i32) -> (i32, i32) {
    %c0_i32 = arith.constant 0 : i32
    %c0_i32_0 = arith.constant 0 : i32
    %c0_i32_1 = arith.constant 0 : i32
    return %c0_i32, %c0_i32_0 : i32, i32
  }
  func.func @transform_4(%arg0: i32) -> (i32, i32, i32) {
    %c0_i32 = arith.constant 0 : i32
    %c0_i32_0 = arith.constant 0 : i32
    %c0_i32_1 = arith.constant 0 : i32
    %c0_i32_2 = arith.constant 0 : i32
    return %c0_i32, %c0_i32_0, %c0_i32_1 : i32, i32, i32
  }
  func.func @transform_5(%arg0: i32) -> (i32, i32, i32) {
    %c0_i32 = arith.constant 0 : i32
    %c0_i32_0 = arith.constant 0 : i32
    %c0_i32_1 = arith.constant 0 : i32
    %c0_i32_2 = arith.constant 0 : i32
    return %c0_i32, %c0_i32_0, %c0_i32_1 : i32, i32, i32
  }
  func.func @transform_6(%arg0: i32) -> (i32, i32) {
    %c0_i32 = arith.constant 0 : i32
    %c0_i32_0 = arith.constant 0 : i32
    %c0_i32_1 = arith.constant 0 : i32
    return %c0_i32, %c0_i32_0 : i32, i32
  }
  func.func @transform_7(%arg0: i32) -> (i32, i32) {
    %c0_i32 = arith.constant 0 : i32
    %c0_i32_0 = arith.constant 0 : i32
    return %arg0, %c0_i32 : i32, i32
  }
  func.func @transform_8(%arg0: i32) -> (i32, i32, i32) {
    %c0_i32 = arith.constant 0 : i32
    %c0_i32_0 = arith.constant 0 : i32
    %c0_i32_1 = arith.constant 0 : i32
    %c0_i32_2 = arith.constant 0 : i32
    return %c0_i32, %c0_i32_0, %c0_i32_1 : i32, i32, i32
  }
  func.func @transform_9(%arg0: i32) -> (i32, i32, i32) {
    %c0_i32 = arith.constant 0 : i32
    %c0_i32_0 = arith.constant 0 : i32
    %c0_i32_1 = arith.constant 0 : i32
    %c0_i32_2 = arith.constant 0 : i32
    return %c0_i32, %c0_i32_0, %c0_i32_1 : i32, i32, i32
  }
}

</mosaic_0001>

<llo_original>
// kernel: lstm_forward_seq.2
$region0: #{lstm_forward_seq.2}
  #allocation0 [shape = 'u32[]', space=smem, size = 0x4, offset = 0x4, fixed_abs, tag = 'smem constant byte address 0x4 - core index']
  #allocation1 [shape = 'u32[144,128]{1,0:T(1,128)}', space=vmem, size = 0x12000, scoped, tag = 'internal scratch']
  %s0 = inlined_call_operand.hbm [shape: f32[64,16], index: 0, kind: input, shape index: {}]
  %s1 = inlined_call_operand.hbm [shape: bf16[16,128], index: 1, kind: input, shape index: {}]
  %s2 = inlined_call_operand.hbm [shape: bf16[128,512], index: 2, kind: input, shape index: {}]
  %s3 = inlined_call_operand.vmem [shape: f32[1,128], index: 3, kind: input, shape index: {}]
  %s4 = inlined_call_operand.vmem [shape: f32[64,512], index: 4, kind: output, shape index: {}]
  %s5 = sld [smem:[#allocation0]]
  $region38: #{lstm_forward_seq.2} parent=0
    _
  %s7 = ssub.s32 1, %s5
  %s8 = scalar_select 0, %s7, %s5
  $region1: #{lstm_forward_seq.2} parent=0
    #allocation2 [shape = 'u8[32768]{0}', space=vmem, size = 0x8000, scoped, tag = 'input window, operand 0, single buffered']
    #allocation3 [shape = 's32[1]{0}', space=sflag, size = 0x4, scoped, tag = 'scoped memory for lstm_forward_seq.2']
    #allocation4 [shape = 'u8[4096]{0}', space=vmem, size = 0x1000, scoped, tag = 'input window, operand 1, single buffered']
    #allocation5 [shape = 's32[1]{0}', space=sflag, size = 0x4, scoped, tag = 'scoped memory for lstm_forward_seq.2']
    #allocation6 [shape = 'u8[131072]{0}', space=vmem, size = 0x20000, scoped, tag = 'input window, operand 2, single buffered']
    %9 = vsyncpa [#allocation3], 0
    %10 = vsyncpa [#allocation5], 0
    // Predicated region
    $region2: #{lstm_forward_seq.2} parent=1 // pred_check
      _
    $region3: #{lstm_forward_seq.2} parent=1 // pred_check_branch
      %12 = sbr.rel (0) target = $region5
    $region4: #{lstm_forward_seq.2} parent=1 // pred_region
      %s14 = ssub.s32 1024, 1024
      %15 = vsyncadd [#allocation3], %s14
      %s16 = sshll.u32 [#allocation2], 4
      %s17 = int_to_ptr.vmem [resolvable:$true] %s16
      %22 = dma.hbm_to_vmem [thread:$0]  %s0, 1024, %s17, [#allocation3], 128, 128, 8
    $region5: #{lstm_forward_seq.2} parent=1 // pred_fallthru
      _
    // Predicated region
    $region6: #{lstm_forward_seq.2} parent=1 // pred_check
      _
    $region7: #{lstm_forward_seq.2} parent=1 // pred_check_branch
      %24 = sbr.rel (0) target = $region9
    $region8: #{lstm_forward_seq.2} parent=1 // pred_region
      %s26 = ssub.s32 128, 128
      %27 = vsyncadd [#allocation5], %s26
      %s28 = sshll.u32 [#allocation4], 4
      %s29 = int_to_ptr.vmem [resolvable:$true] %s28
      %34 = dma.hbm_to_vmem [thread:$0]  %s1, 128, %s29, [#allocation5], 64, 64, 4
    $region9: #{lstm_forward_seq.2} parent=1 // pred_fallthru
      _
    // Predicated region
    $region10: #{lstm_forward_seq.2} parent=1 // pred_check
      _
    $region11: #{lstm_forward_seq.2} parent=1 // pred_check_branch
      %36 = sbr.rel (0) target = $region13
    $region12: #{lstm_forward_seq.2} parent=1 // pred_region
      %s38 = ssub.s32 4096, 4096
      %39 = vsyncadd [#allocation5], %s38
      %s40 = sshll.u32 [#allocation6], 4
      %s41 = int_to_ptr.vmem [resolvable:$true] %s40
      %46 = dma.hbm_to_vmem [thread:$0]  %s2, 4096, %s41, [#allocation5], 256, 256, 16
    $region13: #{lstm_forward_seq.2} parent=1 // pred_fallthru
      _
    // Predicated region
    $region14: #{lstm_forward_seq.2} parent=1 // pred_check
      _
    $region15: #{lstm_forward_seq.2} parent=1 // pred_check_branch
      %48 = sbr.rel (0) target = $region17
    $region16: #{lstm_forward_seq.2} parent=1 // pred_region
      _
    $region17: #{lstm_forward_seq.2} parent=1 // pred_fallthru
      _
    // Predicated region
    $region18: #{lstm_forward_seq.2} parent=1 // pred_check
      _
    $region19: #{lstm_forward_seq.2} parent=1 // pred_check_branch
      %50 = sbr.rel (0) target = $region21
    $region20: #{lstm_forward_seq.2} parent=1 // pred_region
      %51 = dma.done [#allocation3], 1024
    $region21: #{lstm_forward_seq.2} parent=1 // pred_fallthru
      _
    // Predicated region
    $region22: #{lstm_forward_seq.2} parent=1 // pred_check
      _
    $region23: #{lstm_forward_seq.2} parent=1 // pred_check_branch
      %53 = sbr.rel (0) target = $region25
    $region24: #{lstm_forward_seq.2} parent=1 // pred_region
      %54 = dma.done [#allocation5], 128
    $region25: #{lstm_forward_seq.2} parent=1 // pred_fallthru
      _
    // Predicated region
    $region26: #{lstm_forward_seq.2} parent=1 // pred_check
      _
    $region27: #{lstm_forward_seq.2} parent=1 // pred_check_branch
      %56 = sbr.rel (0) target = $region29
    $region28: #{lstm_forward_seq.2} parent=1 // pred_region
      %57 = dma.done [#allocation5], 4096
    $region29: #{lstm_forward_seq.2} parent=1 // pred_fallthru
      _
    %v59 = vld [vmem:[#allocation2] sm:$0xff]
    %v60 = vld [vmem:[#allocation2 + $0x8] sm:$0xff]
    %v61 = vld [vmem:[#allocation2 + $0x10] sm:$0xff]
    %v62 = vld [vmem:[#allocation2 + $0x18] sm:$0xff]
    %v63 = vld [vmem:[#allocation2 + $0x20] sm:$0xff]
    %v64 = vld [vmem:[#allocation2 + $0x28] sm:$0xff]
    %v65 = vld [vmem:[#allocation2 + $0x30] sm:$0xff]
    %v66 = vld [vmem:[#allocation2 + $0x38] sm:$0xff]
    %v67 = vpack.c.bf16 %v60, %v59
    %v68 = vpack.c.bf16 %v62, %v61
    %v69 = vpack.c.bf16 %v64, %v63
    %v70 = vpack.c.bf16 %v66, %v65
    %v71 = vld [vmem:[#allocation4] sm:$0xf]
    %v72 = vld [vmem:[#allocation4 + $0x4] sm:$0xf]
    %v73 = vld [vmem:[%s3] sm:$0x1]
    %v75 = vlaneseq
    %v76 = vshrl.u32 %v75, 7
    %v77 = vsub.s32 0, %v76
    %v78 = vrot.slane %v73, %v77
    %v82 = vunpack.c.l.b16 %v71
    %v83 = vunpack.c.l.b16 %v72
    %v84 = vpack.c.b16 %v83, %v82
    %vm86 = vcmask 130048
    %v88 = vsel %vm86, %v67, 0
    %v91 = vsel %vm86, %v68, 0
    %v94 = vsel %vm86, %v69, 0
    %v97 = vsel %vm86, %v70, 0
    %99 = vmatprep.subr.bf16.mxu0 0
    %100 = vmatpush1.bf16.msra.mxu0 %v84
    %101 = vmatprep.subr.bf16.mxu0 0
    %102 = vmatpush1.bf16.msra.mxu0 0
    %103 = vmatprep.subr.bf16.mxu0 0
    %104 = vmatpush1.bf16.msra.mxu0 0
    %105 = vmatprep.subr.bf16.mxu0 0
    %106 = vmatpush1.bf16.msra.mxu0 0
    %107 = vmatprep.subr.bf16.mxu0 0
    %108 = vmatpush1.bf16.msra.mxu0 0
    %109 = vmatprep.subr.bf16.mxu0 0
    %110 = vmatpush1.bf16.msra.mxu0 0
    %111 = vmatprep.subr.bf16.mxu0 0
    %112 = vmatpush1.bf16.msra.mxu0 0
    %113 = vmatprep.subr.bf16.mxu0 0
    %114 = vmatpush1.bf16.msra.mxu0 0
    %115 = vmatprep.subr.bf16.mxu0 0
    %116 = vmatpush1.bf16.msra.mxu0 0
    %117 = vmatprep.subr.bf16.mxu0 0
    %118 = vmatpush1.bf16.msra.mxu0 0
    %119 = vmatprep.subr.bf16.mxu0 0
    %120 = vmatpush1.bf16.msra.mxu0 0
    %121 = vmatprep.subr.bf16.mxu0 0
    %122 = vmatpush1.bf16.msra.mxu0 0
    %123 = vmatprep.subr.bf16.mxu0 0
    %124 = vmatpush1.bf16.msra.mxu0 0
    %125 = vmatprep.subr.bf16.mxu0 0
    %126 = vmatpush1.bf16.msra.mxu0 0
    %127 = vmatprep.subr.bf16.mxu0 0
    %128 = vmatpush1.bf16.msra.mxu0 0
    %129 = vmatprep.subr.bf16.mxu0 0
    %130 = vmatpush1.bf16.msra.mxu0 0
    %131 = vmatprep.mubr.bf16.mxu0 0
    %132 = vmatmul.mubr.bf16.gmra.mrb[0].mxu0 %v88
    %v133 = vpop.f32.mrb[0].mxu0
    %v134 = vadd.f32 %v78, %v133
    %v135 = vpop.f32.mrb[0].mxu0
    %v136 = vpop.f32.mrb[0].mxu0
    %v137 = vadd.f32 %v78, %v136
    %v138 = vpop.f32.mrb[0].mxu0
    %139 = vmatprep.mubr.bf16.mxu0 0
    %140 = vmatmul.mubr.bf16.gmra.mrb[0].mxu0 %v91
    %v141 = vpop.f32.mrb[0].mxu0
    %v142 = vadd.f32 %v78, %v141
    %v143 = vpop.f32.mrb[0].mxu0
    %v144 = vpop.f32.mrb[0].mxu0
    %v145 = vadd.f32 %v78, %v144
    %v146 = vpop.f32.mrb[0].mxu0
    %147 = vmatprep.mubr.bf16.mxu0 0
    %148 = vmatmul.mubr.bf16.gmra.mrb[0].mxu0 %v94
    %v149 = vpop.f32.mrb[0].mxu0
    %v150 = vadd.f32 %v78, %v149
    %v151 = vpop.f32.mrb[0].mxu0
    %v152 = vpop.f32.mrb[0].mxu0
    %v153 = vadd.f32 %v78, %v152
    %v154 = vpop.f32.mrb[0].mxu0
    %155 = vmatprep.mubr.bf16.mxu0 0
    %156 = vmatmul.mubr.bf16.gmra.mrb[0].mxu0 %v97
    %v157 = vpop.f32.mrb[0].mxu0
    %v158 = vadd.f32 %v78, %v157
    %v159 = vpop.f32.mrb[0].mxu0
    %v160 = vpop.f32.mrb[0].mxu0
    %v161 = vadd.f32 %v78, %v160
    %v162 = vpop.f32.mrb[0].mxu0
    %163 = vdwg.mxu0
    %v164 = vpack.c.bf16 %v137, %v134
    %v165 = vpack.c.bf16 %v145, %v142
    %v166 = vpack.c.bf16 %v153, %v150
    %v167 = vpack.c.bf16 %v161, %v158
    %v168 = vld [vmem:[#allocation6] sm:$0xff]
    %v169 = vld [vmem:[#allocation6 + $0x8] sm:$0xff]
    %v170 = vld [vmem:[#allocation6 + $0x10] sm:$0xff]
    %v171 = vld [vmem:[#allocation6 + $0x18] sm:$0xff]
    %v172 = vld [vmem:[#allocation6 + $0x20] sm:$0xff]
    %v173 = vld [vmem:[#allocation6 + $0x28] sm:$0xff]
    %v174 = vld [vmem:[#allocation6 + $0x30] sm:$0xff]
    %v175 = vld [vmem:[#allocation6 + $0x38] sm:$0xff]
    %v176 = vld [vmem:[#allocation6 + $0x40] sm:$0xff]
    %v177 = vld [vmem:[#allocation6 + $0x48] sm:$0xff]
    %v178 = vld [vmem:[#allocation6 + $0x50] sm:$0xff]
    %v179 = vld [vmem:[#allocation6 + $0x58] sm:$0xff]
    %v180 = vld [vmem:[#allocation6 + $0x60] sm:$0xff]
    %v181 = vld [vmem:[#allocation6 + $0x68] sm:$0xff]
    %v182 = vld [vmem:[#allocation6 + $0x70] sm:$0xff]
    %v183 = vld [vmem:[#allocation6 + $0x78] sm:$0xff]
    %v184 = vld [vmem:[#allocation6 + $0x80] sm:$0xff]
    %v185 = vld [vmem:[#allocation6 + $0x88] sm:$0xff]
    %v186 = vld [vmem:[#allocation6 + $0x90] sm:$0xff]
    %v187 = vld [vmem:[#allocation6 + $0x98] sm:$0xff]
    %v188 = vld [vmem:[#allocation6 + $0xa0] sm:$0xff]
    %v189 = vld [vmem:[#allocation6 + $0xa8] sm:$0xff]
    %v190 = vld [vmem:[#allocation6 + $0xb0] sm:$0xff]
    %v191 = vld [vmem:[#allocation6 + $0xb8] sm:$0xff]
    %v192 = vld [vmem:[#allocation6 + $0xc0] sm:$0xff]
    %v193 = vld [vmem:[#allocation6 + $0xc8] sm:$0xff]
    %v194 = vld [vmem:[#allocation6 + $0xd0] sm:$0xff]
    %v195 = vld [vmem:[#allocation6 + $0xd8] sm:$0xff]
    %v196 = vld [vmem:[#allocation6 + $0xe0] sm:$0xff]
    %v197 = vld [vmem:[#allocation6 + $0xe8] sm:$0xff]
    %v198 = vld [vmem:[#allocation6 + $0xf0] sm:$0xff]
    %v199 = vld [vmem:[#allocation6 + $0xf8] sm:$0xff]
    %v232 = vunpack.c.l.b16 %v168
    %v233 = vunpack.c.h.b16 %v168
    %v234 = vunpack.c.l.b16 %v169
    %v235 = vunpack.c.h.b16 %v169
    %v236 = vunpack.c.l.b16 %v170
    %v237 = vunpack.c.h.b16 %v170
    %v238 = vunpack.c.l.b16 %v171
    %v239 = vunpack.c.h.b16 %v171
    %v240 = vunpack.c.l.b16 %v172
    %v241 = vunpack.c.h.b16 %v172
    %v242 = vunpack.c.l.b16 %v173
    %v243 = vunpack.c.h.b16 %v173
    %v244 = vunpack.c.l.b16 %v174
    %v245 = vunpack.c.h.b16 %v174
    %v246 = vunpack.c.l.b16 %v175
    %v247 = vunpack.c.h.b16 %v175
    %v248 = vunpack.c.l.b16 %v176
    %v249 = vunpack.c.h.b16 %v176
    %v250 = vunpack.c.l.b16 %v177
    %v251 = vunpack.c.h.b16 %v177
    %v252 = vunpack.c.l.b16 %v178
    %v253 = vunpack.c.h.b16 %v178
    %v254 = vunpack.c.l.b16 %v179
    %v255 = vunpack.c.h.b16 %v179
    %v256 = vunpack.c.l.b16 %v180
    %v257 = vunpack.c.h.b16 %v180
    %v258 = vunpack.c.l.b16 %v181
    %v259 = vunpack.c.h.b16 %v181
    %v260 = vunpack.c.l.b16 %v182
    %v261 = vunpack.c.h.b16 %v182
    %v262 = vunpack.c.l.b16 %v183
    %v263 = vunpack.c.h.b16 %v183
    %v264 = vunpack.c.l.b16 %v184
    %v265 = vunpack.c.h.b16 %v184
    %v266 = vunpack.c.l.b16 %v185
    %v267 = vunpack.c.h.b16 %v185
    %v268 = vunpack.c.l.b16 %v186
    %v269 = vunpack.c.h.b16 %v186
    %v270 = vunpack.c.l.b16 %v187
    %v271 = vunpack.c.h.b16 %v187
    %v272 = vunpack.c.l.b16 %v188
    %v273 = vunpack.c.h.b16 %v188
    %v274 = vunpack.c.l.b16 %v189
    %v275 = vunpack.c.h.b16 %v189
    %v276 = vunpack.c.l.b16 %v190
    %v277 = vunpack.c.h.b16 %v190
    %v278 = vunpack.c.l.b16 %v191
    %v279 = vunpack.c.h.b16 %v191
    %v280 = vunpack.c.l.b16 %v192
    %v281 = vunpack.c.h.b16 %v192
    %v282 = vunpack.c.l.b16 %v193
    %v283 = vunpack.c.h.b16 %v193
    %v284 = vunpack.c.l.b16 %v194
    %v285 = vunpack.c.h.b16 %v194
    %v286 = vunpack.c.l.b16 %v195
    %v287 = vunpack.c.h.b16 %v195
    %v288 = vunpack.c.l.b16 %v196
    %v289 = vunpack.c.h.b16 %v196
    %v290 = vunpack.c.l.b16 %v197
    %v291 = vunpack.c.h.b16 %v197
    %v292 = vunpack.c.l.b16 %v198
    %v293 = vunpack.c.h.b16 %v198
    %v294 = vunpack.c.l.b16 %v199
    %v295 = vunpack.c.h.b16 %v199
    %v296 = vpack.c.b16 %v236, %v232
    %v297 = vpack.c.b16 %v237, %v233
    %v298 = vpack.c.b16 %v238, %v234
    %v299 = vpack.c.b16 %v239, %v235
    %v300 = vpack.c.b16 %v244, %v240
    %v301 = vpack.c.b16 %v245, %v241
    %v302 = vpack.c.b16 %v246, %v242
    %v303 = vpack.c.b16 %v247, %v243
    %v304 = vpack.c.b16 %v252, %v248
    %v305 = vpack.c.b16 %v253, %v249
    %v306 = vpack.c.b16 %v254, %v250
    %v307 = vpack.c.b16 %v255, %v251
    %v308 = vpack.c.b16 %v260, %v256
    %v309 = vpack.c.b16 %v261, %v257
    %v310 = vpack.c.b16 %v262, %v258
    %v311 = vpack.c.b16 %v263, %v259
    %v312 = vpack.c.b16 %v268, %v264
    %v313 = vpack.c.b16 %v269, %v265
    %v314 = vpack.c.b16 %v270, %v266
    %v315 = vpack.c.b16 %v271, %v267
    %v316 = vpack.c.b16 %v276, %v272
    %v317 = vpack.c.b16 %v277, %v273
    %v318 = vpack.c.b16 %v278, %v274
    %v319 = vpack.c.b16 %v279, %v275
    %v320 = vpack.c.b16 %v284, %v280
    %v321 = vpack.c.b16 %v285, %v281
    %v322 = vpack.c.b16 %v286, %v282
    %v323 = vpack.c.b16 %v287, %v283
    %v324 = vpack.c.b16 %v292, %v288
    %v325 = vpack.c.b16 %v293, %v289
    %v326 = vpack.c.b16 %v294, %v290
    %v327 = vpack.c.b16 %v295, %v291
    %360 = vmatprep.subr.bf16.mxu0 %v297
    %361 = vmatpush1.bf16.msra.mxu0 %v296
    %362 = vmatprep.subr.bf16.mxu0 %v301
    %363 = vmatpush1.bf16.msra.mxu0 %v300
    %364 = vmatprep.subr.bf16.mxu0 %v305
    %365 = vmatpush1.bf16.msra.mxu0 %v304
    %366 = vmatprep.subr.bf16.mxu0 %v309
    %367 = vmatpush1.bf16.msra.mxu0 %v308
    %368 = vmatprep.subr.bf16.mxu0 %v313
    %369 = vmatpush1.bf16.msra.mxu0 %v312
    %370 = vmatprep.subr.bf16.mxu0 %v317
    %371 = vmatpush1.bf16.msra.mxu0 %v316
    %372 = vmatprep.subr.bf16.mxu0 %v321
    %373 = vmatpush1.bf16.msra.mxu0 %v320
    %374 = vmatprep.subr.bf16.mxu0 %v325
    %375 = vmatpush1.bf16.msra.mxu0 %v324
    %376 = vmatprep.subr.bf16.mxu0 0
    %377 = vmatpush1.bf16.msra.mxu0 0
    %378 = vmatprep.subr.bf16.mxu0 0
    %379 = vmatpush1.bf16.msra.mxu0 0
    %380 = vmatprep.subr.bf16.mxu0 0
    %381 = vmatpush1.bf16.msra.mxu0 0
    %382 = vmatprep.subr.bf16.mxu0 0
    %383 = vmatpush1.bf16.msra.mxu0 0
    %384 = vmatprep.subr.bf16.mxu0 0
    %385 = vmatpush1.bf16.msra.mxu0 0
    %386 = vmatprep.subr.bf16.mxu0 0
    %387 = vmatpush1.bf16.msra.mxu0 0
    %388 = vmatprep.subr.bf16.mxu0 0
    %389 = vmatpush1.bf16.msra.mxu0 0
    %390 = vmatprep.subr.bf16.mxu0 0
    %391 = vmatpush1.bf16.msra.mxu0 0
    %392 = vmatprep.mubr.bf16.mxu0 0
    %393 = vmatmul.mubr.bf16.gmra.mrb[0].mxu0 %v164
    %v394 = vpop.f32.mrb[0].mxu0
    %v395 = vadd.f32 0.0, %v394
    %v396 = vpop.f32.mrb[0].mxu0
    %v397 = vadd.f32 0.0, %v396
    %v398 = vpop.f32.mrb[0].mxu0
    %v399 = vadd.f32 0.0, %v398
    %v400 = vpop.f32.mrb[0].mxu0
    %v401 = vadd.f32 0.0, %v400
    %402 = vmatprep.mubr.bf16.mxu0 0
    %403 = vmatmul.mubr.bf16.gmra.mrb[0].mxu0 %v165
    %v404 = vpop.f32.mrb[0].mxu0
    %v405 = vadd.f32 0.0, %v404
    %v406 = vpop.f32.mrb[0].mxu0
    %v407 = vadd.f32 0.0, %v406
    %v408 = vpop.f32.mrb[0].mxu0
    %v409 = vadd.f32 0.0, %v408
    %v410 = vpop.f32.mrb[0].mxu0
    %v411 = vadd.f32 0.0, %v410
    %412 = vmatprep.mubr.bf16.mxu0 0
    %413 = vmatmul.mubr.bf16.gmra.mrb[0].mxu0 %v166
    %v414 = vpop.f32.mrb[0].mxu0
    %v415 = vadd.f32 0.0, %v414
    %v416 = vpop.f32.mrb[0].mxu0
    %v417 = vadd.f32 0.0, %v416
    %v418 = vpop.f32.mrb[0].mxu0
    %v419 = vadd.f32 0.0, %v418
    %v420 = vpop.f32.mrb[0].mxu0
    %v421 = vadd.f32 0.0, %v420
    %422 = vmatprep.mubr.bf16.mxu0 0
    %423 = vmatmul.mubr.bf16.gmra.mrb[0].mxu0 %v167
    %v424 = vpop.f32.mrb[0].mxu0
    %v425 = vadd.f32 0.0, %v424
    %v426 = vpop.f32.mrb[0].mxu0
    %v427 = vadd.f32 0.0, %v426
    %v428 = vpop.f32.mrb[0].mxu0
    %v429 = vadd.f32 0.0, %v428
    %v430 = vpop.f32.mrb[0].mxu0
    %v431 = vadd.f32 0.0, %v430
    %432 = vdwg.mxu0
    %433 = vmatprep.subr.bf16.mxu0 %v299
    %434 = vmatpush1.bf16.msra.mxu0 %v298
    %435 = vmatprep.subr.bf16.mxu0 %v303
    %436 = vmatpush1.bf16.msra.mxu0 %v302
    %437 = vmatprep.subr.bf16.mxu0 %v307
    %438 = vmatpush1.bf16.msra.mxu0 %v306
    %439 = vmatprep.subr.bf16.mxu0 %v311
    %440 = vmatpush1.bf16.msra.mxu0 %v310
    %441 = vmatprep.subr.bf16.mxu0 %v315
    %442 = vmatpush1.bf16.msra.mxu0 %v314
    %443 = vmatprep.subr.bf16.mxu0 %v319
    %444 = vmatpush1.bf16.msra.mxu0 %v318
    %445 = vmatprep.subr.bf16.mxu0 %v323
    %446 = vmatpush1.bf16.msra.mxu0 %v322
    %447 = vmatprep.subr.bf16.mxu0 %v327
    %448 = vmatpush1.bf16.msra.mxu0 %v326
    %449 = vmatprep.subr.bf16.mxu0 0
    %450 = vmatpush1.bf16.msra.mxu0 0
    %451 = vmatprep.subr.bf16.mxu0 0
    %452 = vmatpush1.bf16.msra.mxu0 0
    %453 = vmatprep.subr.bf16.mxu0 0
    %454 = vmatpush1.bf16.msra.mxu0 0
    %455 = vmatprep.subr.bf16.mxu0 0
    %456 = vmatpush1.bf16.msra.mxu0 0
    %457 = vmatprep.subr.bf16.mxu0 0
    %458 = vmatpush1.bf16.msra.mxu0 0
    %459 = vmatprep.subr.bf16.mxu0 0
    %460 = vmatpush1.bf16.msra.mxu0 0
    %461 = vmatprep.subr.bf16.mxu0 0
    %462 = vmatpush1.bf16.msra.mxu0 0
    %463 = vmatprep.subr.bf16.mxu0 0
    %464 = vmatpush1.bf16.msra.mxu0 0
    %465 = vmatprep.mubr.bf16.mxu0 0
    %466 = vmatmul.mubr.bf16.gmra.mrb[0].mxu0 %v164
    %v467 = vpop.f32.mrb[0].mxu0
    %v468 = vadd.f32 0.0, %v467
    %v469 = vpop.f32.mrb[0].mxu0
    %v470 = vadd.f32 0.0, %v469
    %v471 = vpop.f32.mrb[0].mxu0
    %v472 = vadd.f32 0.0, %v471
    %v473 = vpop.f32.mrb[0].mxu0
    %v474 = vadd.f32 0.0, %v473
    %475 = vmatprep.mubr.bf16.mxu0 0
    %476 = vmatmul.mubr.bf16.gmra.mrb[0].mxu0 %v165
    %v477 = vpop.f32.mrb[0].mxu0
    %v478 = vadd.f32 0.0, %v477
    %v479 = vpop.f32.mrb[0].mxu0
    %v480 = vadd.f32 0.0, %v479
    %v481 = vpop.f32.mrb[0].mxu0
    %v482 = vadd.f32 0.0, %v481
    %v483 = vpop.f32.mrb[0].mxu0
    %v484 = vadd.f32 0.0, %v483
    %485 = vmatprep.mubr.bf16.mxu0 0
    %486 = vmatmul.mubr.bf16.gmra.mrb[0].mxu0 %v166
    %v487 = vpop.f32.mrb[0].mxu0
    %v488 = vadd.f32 0.0, %v487
    %v489 = vpop.f32.mrb[0].mxu0
    %v490 = vadd.f32 0.0, %v489
    %v491 = vpop.f32.mrb[0].mxu0
    %v492 = vadd.f32 0.0, %v491
    %v493 = vpop.f32.mrb[0].mxu0
    %v494 = vadd.f32 0.0, %v493
    %495 = vmatprep.mubr.bf16.mxu0 0
    %496 = vmatmul.mubr.bf16.gmra.mrb[0].mxu0 %v167
    %v497 = vpop.f32.mrb[0].mxu0
    %v498 = vadd.f32 0.0, %v497
    %v499 = vpop.f32.mrb[0].mxu0
    %v500 = vadd.f32 0.0, %v499
    %v501 = vpop.f32.mrb[0].mxu0
    %v502 = vadd.f32 0.0, %v501
    %v503 = vpop.f32.mrb[0].mxu0
    %v504 = vadd.f32 0.0, %v503
    %505 = vdwg.mxu0
    %506 = vst [vmem:[%s4] sm:$0xff] %v395
    %507 = vst [vmem:[%s4 + $0x8] sm:$0xff] %v397
    %508 = vst [vmem:[%s4 + $0x10] sm:$0xff] %v468
    %509 = vst [vmem:[%s4 + $0x18] sm:$0xff] %v470
    %510 = vst [vmem:[%s4 + $0x20] sm:$0xff] %v399
    %511 = vst [vmem:[%s4 + $0x28] sm:$0xff] %v401
    %512 = vst [vmem:[%s4 + $0x30] sm:$0xff] %v472
    %513 = vst [vmem:[%s4 + $0x38] sm:$0xff] %v474
    %514 = vst [vmem:[%s4 + $0x40] sm:$0xff] %v405
    %515 = vst [vmem:[%s4 + $0x48] sm:$0xff] %v407
    %516 = vst [vmem:[%s4 + $0x50] sm:$0xff] %v478
    %517 = vst [vmem:[%s4 + $0x58] sm:$0xff] %v480
    %518 = vst [vmem:[%s4 + $0x60] sm:$0xff] %v409
    %519 = vst [vmem:[%s4 + $0x68] sm:$0xff] %v411
    %520 = vst [vmem:[%s4 + $0x70] sm:$0xff] %v482
    %521 = vst [vmem:[%s4 + $0x78] sm:$0xff] %v484
    %522 = vst [vmem:[%s4 + $0x80] sm:$0xff] %v415
    %523 = vst [vmem:[%s4 + $0x88] sm:$0xff] %v417
    %524 = vst [vmem:[%s4 + $0x90] sm:$0xff] %v488
    %525 = vst [vmem:[%s4 + $0x98] sm:$0xff] %v490
    %526 = vst [vmem:[%s4 + $0xa0] sm:$0xff] %v419
    %527 = vst [vmem:[%s4 + $0xa8] sm:$0xff] %v421
    %528 = vst [vmem:[%s4 + $0xb0] sm:$0xff] %v492
    %529 = vst [vmem:[%s4 + $0xb8] sm:$0xff] %v494
    %530 = vst [vmem:[%s4 + $0xc0] sm:$0xff] %v425
    %531 = vst [vmem:[%s4 + $0xc8] sm:$0xff] %v427
    %532 = vst [vmem:[%s4 + $0xd0] sm:$0xff] %v498
    %533 = vst [vmem:[%s4 + $0xd8] sm:$0xff] %v500
    %534 = vst [vmem:[%s4 + $0xe0] sm:$0xff] %v429
    %535 = vst [vmem:[%s4 + $0xe8] sm:$0xff] %v431
    %536 = vst [vmem:[%s4 + $0xf0] sm:$0xff] %v502
    %537 = vst [vmem:[%s4 + $0xf8] sm:$0xff] %v504
    // Predicated region
    $region30: #{lstm_forward_seq.2} parent=1 // pred_check
      _
    $region31: #{lstm_forward_seq.2} parent=1 // pred_check_branch
      %539 = sbr.rel (0) target = $region33
    $region32: #{lstm_forward_seq.2} parent=1 // pred_region
      _
    $region33: #{lstm_forward_seq.2} parent=1 // pred_fallthru
      _
    // Predicated region
    $region34: #{lstm_forward_seq.2} parent=1 // pred_check
      _
    $region35: #{lstm_forward_seq.2} parent=1 // pred_check_branch
      %541 = sbr.rel (0) target = $region37
    $region36: #{lstm_forward_seq.2} parent=1 // pred_region
      _
    $region37: #{lstm_forward_seq.2} parent=1 // pred_fallthru
      _
    %542 = vsyncpa [#allocation3], 1
    %543 = vsyncpa [#allocation5], 1

// kernel: lstm_forward_seq.3
$region0: #{lstm_forward_seq.3}
  #allocation0 [shape = 'u32[]', space=smem, size = 0x4, offset = 0x4, fixed_abs, tag = 'smem constant byte address 0x4 - core index']
  #allocation1 [shape = 'u32[144,128]{1,0:T(1,128)}', space=vmem, size = 0x12000, scoped, tag = 'internal scratch']
  %s0 = inlined_call_operand.vmem [shape: f32[64,512], index: 0, kind: input, shape index: {}]
  %s1 = inlined_call_operand.hbm [shape: bf16[1,128,512], index: 1, kind: input, shape index: {}]
  %s2 = inlined_call_operand.vmem [shape: bf16[2,128,512], index: 2, kind: input, shape index: {}]
  %s3 = inlined_call_operand.hbm [shape: f32[1,1152], index: 3, kind: input, shape index: {}]
  %s4 = inlined_call_operand.vmem [shape: f32[2,8,128], index: 4, kind: input, shape index: {}, may-alias: {4,8}]
  %s5 = inlined_call_operand.vmem [shape: f32[2,8,128], index: 5, kind: input, shape index: {}, may-alias: {5,9}]
  %s6 = inlined_call_operand.vmem [shape: bf16[128,128], index: 6, kind: input, shape index: {}]
  %s7 = inlined_call_operand.hbm [shape: f32[64,128], index: 7, kind: output, shape index: {0}]
  %s8 = inlined_call_operand.vmem [shape: f32[2,8,128], index: 8, kind: output, shape index: {1}, may-alias: {4,8}]
  %s9 = inlined_call_operand.vmem [shape: f32[2,8,128], index: 9, kind: output, shape index: {2}, may-alias: {5,9}]
  %10 = xla_tuple %s7, %s8, %s9
  %s11 = sld [smem:[#allocation0]]
  $region89: #{lstm_forward_seq.3} parent=0
    _
  %s13 = ssub.s32 1, %s11
  %s14 = scalar_select 0, %s13, %s11
  $region1: #{lstm_forward_seq.3} parent=0
    #allocation2 [shape = 'u8[131072]{0}', space=vmem, size = 0x20000, scoped, tag = 'input window, operand 1, single buffered']
    #allocation3 [shape = 's32[2]{0}', space=sflag, size = 0x8, scoped, tag = 'scoped memory for lstm_forward_seq.3']
    #allocation4 [shape = 's32[2]{0}', space=sflag, size = 0x8, scoped, tag = 'scoped memory for lstm_forward_seq.3']
    #allocation5 [shape = 'u8[4608]{0}', space=vmem, size = 0x1400, scoped, tag = 'input window, operand 3, single buffered']
    #allocation6 [shape = 's32[1]{0}', space=sflag, size = 0x4, scoped, tag = 'scoped memory for lstm_forward_seq.3']
    #allocation7 [shape = 'u8[8192]{0}', space=vmem, size = 0x2000, scoped, tag = 'output window, operand 0']
    %15 = vsyncpa [#allocation3], 0
    %16 = vsyncpa [#allocation6], 0
    %17 = vsyncpa [#allocation4], 0
    %s18 = scalar_lea.sflag [#allocation4], 1
    %19 = vsyncpa %s18, 0
    loop: start=0, step=1, limit=10
    $region2: #{lstm_forward_seq.3} parent=1 // loop_pre_header
      _
    $region3: #{lstm_forward_seq.3} parent=1 // loop_header
      %s21 = sphi 0, %s25
      %p22 = scmp.ge.s32.totalorder %s21, 10
      %s31 = sphi 0, %s33
      %s34 = sphi 0, %s31
      %s35 = sphi 0, %s34
      %s51 = sphi 0, %s35
      %s55 = sphi 0, %s55
      %s57 = sphi 0, %s55
      %s58 = sphi 0, %s57
      %s72 = sphi 0, %s58
      %s76 = sphi 0, %s76
      %s78 = sphi 0, %s76
      %s79 = sphi 0, %s78
      %s93 = sphi 0, %s79
      %s97 = sphi 0, %s97
      %s99 = sphi 0, %s97
      %s100 = sphi 0, %s99
      %s114 = sphi 0, %s100
      %s118 = sphi 0, %s118
      %s120 = sphi 0, %s118
      %s121 = sphi 0, %s120
      %s135 = sphi 0, %s121
      %s139 = sphi 0, %s139
      %s141 = sphi 0, %s139
      %s142 = sphi 0, %s141
      %s156 = sphi 0, %s142
      %s160 = sphi 0, %s160
      %s162 = sphi 0, %s160
      %s163 = sphi 0, %s162
      %s177 = sphi 0, %s163
      %s183 = sphi 0, %s185
      %s186 = sphi 0, %s183
      %s187 = sphi 0, %s186
      %s203 = sphi 0, %s187
      %s207 = sphi 0, %s207
      %s209 = sphi 0, %s207
      %s210 = sphi 0, %s209
      %s224 = sphi 0, %s210
      %s228 = sphi 0, %s228
      %s230 = sphi 0, %s228
      %s231 = sphi 0, %s230
      %s245 = sphi 0, %s231
    $region4: #{lstm_forward_seq.3} parent=1 // loop_header_branch
      %24 = sbr.rel (%p22) target = $region8
    $region5: #{lstm_forward_seq.3} parent=1 // loop_body
      %s26 = ssub.s32 %s21, 1
      %s27 = ssub.s32 %s21, 2
      %s28 = sadd.s32 %s21, 1
      %s29 = ssub.s32 %s21, %s28
      %p30 = scmp.eq.s32.totalorder %s29, 0
      %s32 = sadd.s32 %s31, 1
      %s33 = scalar_select %p30, %s31, %s32
      %p36 = pneg %p30
      %p37 = scmp.eq.s32.totalorder %s21, 7
      %p38 = por %p36, %p37
      %p39 = scmp.ne.s32.totalorder %s31, %s34
      %p40 = scmp.eq.s32.totalorder %s21, 0
      %p41 = por %p39, %p40
      %p42 = scmp.ne.s32.totalorder %s31, %s34
      %p43 = scmp.eq.s32.totalorder %s26, 7
      %p44 = por %p42, %p43
      %p45 = scmp.ne.s32.totalorder %s34, %s35
      %p46 = scmp.eq.s32.totalorder %s26, 0
      %p47 = por %p45, %p46
      %p48 = scmp.ne.s32.totalorder %s34, %s35
      %p49 = scmp.eq.s32.totalorder %s27, 7
      %p50 = por %p48, %p49
      %p52 = scmp.ne.s32.totalorder %s35, %s51
      %p53 = scmp.eq.s32.totalorder %s27, 0
      %p54 = por %p52, %p53
      %s56 = sadd.s32 %s55, 1
      %p59 = scmp.eq.s32.totalorder %s21, 7
      %p60 = scmp.ne.s32.totalorder %s55, %s57
      %p61 = scmp.eq.s32.totalorder %s21, 0
      %p62 = por %p60, %p61
      %p63 = scmp.ne.s32.totalorder %s55, %s57
      %p64 = scmp.eq.s32.totalorder %s26, 7
      %p65 = por %p63, %p64
      %p66 = scmp.ne.s32.totalorder %s57, %s58
      %p67 = scmp.eq.s32.totalorder %s26, 0
      %p68 = por %p66, %p67
      %p69 = scmp.ne.s32.totalorder %s57, %s58
      %p70 = scmp.eq.s32.totalorder %s27, 7
      %p71 = por %p69, %p70
      %p73 = scmp.ne.s32.totalorder %s58, %s72
      %p74 = scmp.eq.s32.totalorder %s27, 0
      %p75 = por %p73, %p74
      %s77 = sadd.s32 %s76, 1
      %p80 = scmp.eq.s32.totalorder %s21, 7
      %p81 = scmp.ne.s32.totalorder %s76, %s78
      %p82 = scmp.eq.s32.totalorder %s21, 0
      %p83 = por %p81, %p82
      %p84 = scmp.ne.s32.totalorder %s76, %s78
      %p85 = scmp.eq.s32.totalorder %s26, 7
      %p86 = por %p84, %p85
      %p87 = scmp.ne.s32.totalorder %s78, %s79
      %p88 = scmp.eq.s32.totalorder %s26, 0
      %p89 = por %p87, %p88
      %p90 = scmp.ne.s32.totalorder %s78, %s79
      %p91 = scmp.eq.s32.totalorder %s27, 7
      %p92 = por %p90, %p91
      %p94 = scmp.ne.s32.totalorder %s79, %s93
      %p95 = scmp.eq.s32.totalorder %s27, 0
      %p96 = por %p94, %p95
      %s98 = sadd.s32 %s97, 1
      %p101 = scmp.eq.s32.totalorder %s21, 7
      %p102 = scmp.ne.s32.totalorder %s97, %s99
      %p103 = scmp.eq.s32.totalorder %s21, 0
      %p104 = por %p102, %p103
      %p105 = scmp.ne.s32.totalorder %s97, %s99
      %p106 = scmp.eq.s32.totalorder %s26, 7
      %p107 = por %p105, %p106
      %p108 = scmp.ne.s32.totalorder %s99, %s100
      %p109 = scmp.eq.s32.totalorder %s26, 0
      %p110 = por %p108, %p109
      %p111 = scmp.ne.s32.totalorder %s99, %s100
      %p112 = scmp.eq.s32.totalorder %s27, 7
      %p113 = por %p111, %p112
      %p115 = scmp.ne.s32.totalorder %s100, %s114
      %p116 = scmp.eq.s32.totalorder %s27, 0
      %p117 = por %p115, %p116
      %s119 = sadd.s32 %s118, 1
      %p122 = scmp.eq.s32.totalorder %s21, 7
      %p123 = scmp.ne.s32.totalorder %s118, %s120
      %p124 = scmp.eq.s32.totalorder %s21, 0
      %p125 = por %p123, %p124
      %p126 = scmp.ne.s32.totalorder %s118, %s120
      %p127 = scmp.eq.s32.totalorder %s26, 7
      %p128 = por %p126, %p127
      %p129 = scmp.ne.s32.totalorder %s120, %s121
      %p130 = scmp.eq.s32.totalorder %s26, 0
      %p131 = por %p129, %p130
      %p132 = scmp.ne.s32.totalorder %s120, %s121
      %p133 = scmp.eq.s32.totalorder %s27, 7
      %p134 = por %p132, %p133
      %p136 = scmp.ne.s32.totalorder %s121, %s135
      %p137 = scmp.eq.s32.totalorder %s27, 0
      %p138 = por %p136, %p137
      %s140 = sadd.s32 %s139, 1
      %p143 = scmp.eq.s32.totalorder %s21, 7
      %p144 = scmp.ne.s32.totalorder %s139, %s141
      %p145 = scmp.eq.s32.totalorder %s21, 0
      %p146 = por %p144, %p145
      %p147 = scmp.ne.s32.totalorder %s139, %s141
      %p148 = scmp.eq.s32.totalorder %s26, 7
      %p149 = por %p147, %p148
      %p150 = scmp.ne.s32.totalorder %s141, %s142
      %p151 = scmp.eq.s32.totalorder %s26, 0
      %p152 = por %p150, %p151
      %p153 = scmp.ne.s32.totalorder %s141, %s142
      %p154 = scmp.eq.s32.totalorder %s27, 7
      %p155 = por %p153, %p154
      %p157 = scmp.ne.s32.totalorder %s142, %s156
      %p158 = scmp.eq.s32.totalorder %s27, 0
      %p159 = por %p157, %p158
      %s161 = sadd.s32 %s160, 1
      %p164 = scmp.eq.s32.totalorder %s21, 7
      %p165 = scmp.ne.s32.totalorder %s160, %s162
      %p166 = scmp.eq.s32.totalorder %s21, 0
      %p167 = por %p165, %p166
      %p168 = scmp.ne.s32.totalorder %s160, %s162
      %p169 = scmp.eq.s32.totalorder %s26, 7
      %p170 = por %p168, %p169
      %p171 = scmp.ne.s32.totalorder %s162, %s163
      %p172 = scmp.eq.s32.totalorder %s26, 0
      %p173 = por %p171, %p172
      %p174 = scmp.ne.s32.totalorder %s162, %s163
      %p175 = scmp.eq.s32.totalorder %s27, 7
      %p176 = por %p174, %p175
      %p178 = scmp.ne.s32.totalorder %s163, %s177
      %p179 = scmp.eq.s32.totalorder %s27, 0
      %p180 = por %p178, %p179
      %s181 = ssub.s32 %s21, %s28
      %p182 = scmp.eq.s32.totalorder %s181, 0
      %s184 = sadd.s32 %s183, 1
      %s185 = scalar_select %p182, %s183, %s184
      %p188 = pneg %p182
      %p189 = scmp.eq.s32.totalorder %s21, 7
      %p190 = por %p188, %p189
      %p191 = scmp.ne.s32.totalorder %s183, %s186
      %p192 = scmp.eq.s32.totalorder %s21, 0
      %p193 = por %p191, %p192
      %p194 = scmp.ne.s32.totalorder %s183, %s186
      %p195 = scmp.eq.s32.totalorder %s26, 7
      %p196 = por %p194, %p195
      %p197 = scmp.ne.s32.totalorder %s186, %s187
      %p198 = scmp.eq.s32.totalorder %s26, 0
      %p199 = por %p197, %p198
      %p200 = scmp.ne.s32.totalorder %s186, %s187
      %p201 = scmp.eq.s32.totalorder %s27, 7
      %p202 = por %p200, %p201
      %p204 = scmp.ne.s32.totalorder %s187, %s203
      %p205 = scmp.eq.s32.totalorder %s27, 0
      %p206 = por %p204, %p205
      %s208 = sadd.s32 %s207, 1
      %p211 = scmp.eq.s32.totalorder %s21, 7
      %p212 = scmp.ne.s32.totalorder %s207, %s209
      %p213 = scmp.eq.s32.totalorder %s21, 0
      %p214 = por %p212, %p213
      %p215 = scmp.ne.s32.totalorder %s207, %s209
      %p216 = scmp.eq.s32.totalorder %s26, 7
      %p217 = por %p215, %p216
      %p218 = scmp.ne.s32.totalorder %s209, %s210
      %p219 = scmp.eq.s32.totalorder %s26, 0
      %p220 = por %p218, %p219
      %p221 = scmp.ne.s32.totalorder %s209, %s210
      %p222 = scmp.eq.s32.totalorder %s27, 7
      %p223 = por %p221, %p222
      %p225 = scmp.ne.s32.totalorder %s210, %s224
      %p226 = scmp.eq.s32.totalorder %s27, 0
      %p227 = por %p225, %p226
      %s229 = sadd.s32 %s228, 1
      %p232 = scmp.eq.s32.totalorder %s21, 7
      %p233 = scmp.ne.s32.totalorder %s228, %s230
      %p234 = scmp.eq.s32.totalorder %s21, 0
      %p235 = por %p233, %p234
      %p236 = scmp.ne.s32.totalorder %s228, %s230
      %p237 = scmp.eq.s32.totalorder %s26, 7
      %p238 = por %p236, %p237
      %p239 = scmp.ne.s32.totalorder %s230, %s231
      %p240 = scmp.eq.s32.totalorder %s26, 0
      %p241 = por %p239, %p240
      %p242 = scmp.ne.s32.totalorder %s230, %s231
      %p243 = scmp.eq.s32.totalorder %s27, 7
      %p244 = por %p242, %p243
      %p246 = scmp.ne.s32.totalorder %s231, %s245
      %p247 = scmp.eq.s32.totalorder %s27, 0
      %p248 = por %p246, %p247
      %p249 = scmp.le.s32.totalorder 1, %s21
      %p250 = scmp.lt.s32.totalorder %s21, 9
      %p251 = pnand %p249, %p250
      %p252 = pneg %p251
      // Predicated region
      $region9: #{lstm_forward_seq.3} parent=5 // pred_check
        _
      $region10: #{lstm_forward_seq.3} parent=5 // pred_check_branch
        %254 = sbr.rel (%p251) target = $region12
      $region11: #{lstm_forward_seq.3} parent=5 // pred_region
        %s255 = ssub.s32 %s21, 1
        // Predicated region
        $region13: #{lstm_forward_seq.3} parent=11 // pred_check
          %p256 = pneg %p68
        $region14: #{lstm_forward_seq.3} parent=11 // pred_check_branch
          %258 = sbr.rel (%p256) target = $region16
        $region15: #{lstm_forward_seq.3} parent=11 // pred_region
          %s260 = ssub.s32 4096, 4096
          %261 = vsyncadd [#allocation3], %s260
          %s262 = sshll.u32 [#allocation2], 4
          %s263 = int_to_ptr.vmem [resolvable:$true] %s262
          %268 = dma.hbm_to_vmem [thread:$0]  %s1, 4096, %s263, [#allocation3], 256, 256, 16
        $region16: #{lstm_forward_seq.3} parent=11 // pred_fallthru
          _
        // Predicated region
        $region17: #{lstm_forward_seq.3} parent=11 // pred_check
          %p269 = pneg %p89
        $region18: #{lstm_forward_seq.3} parent=11 // pred_check_branch
          %271 = sbr.rel (%p269) target = $region20
        $region19: #{lstm_forward_seq.3} parent=11 // pred_region
          _
        $region20: #{lstm_forward_seq.3} parent=11 // pred_fallthru
          _
        // Predicated region
        $region21: #{lstm_forward_seq.3} parent=11 // pred_check
          %p272 = pneg %p110
        $region22: #{lstm_forward_seq.3} parent=11 // pred_check_branch
          %274 = sbr.rel (%p272) target = $region24
        $region23: #{lstm_forward_seq.3} parent=11 // pred_region
          %s276 = ssub.s32 144, 144
          %277 = vsyncadd [#allocation6], %s276
          %s279 = sshll.u32 [#allocation5], 4
          %s280 = int_to_ptr.vmem [resolvable:$true] %s279
          %282 = dma.hbm_to_vmem [thread:$0]  %s3, 144, %s280, [#allocation6]
        $region24: #{lstm_forward_seq.3} parent=11 // pred_fallthru
          _
        // Predicated region
        $region25: #{lstm_forward_seq.3} parent=11 // pred_check
          %p283 = pneg %p131
        $region26: #{lstm_forward_seq.3} parent=11 // pred_check_branch
          %285 = sbr.rel (%p283) target = $region28
        $region27: #{lstm_forward_seq.3} parent=11 // pred_region
          _
        $region28: #{lstm_forward_seq.3} parent=11 // pred_fallthru
          _
        // Predicated region
        $region29: #{lstm_forward_seq.3} parent=11 // pred_check
          %p286 = pneg %p152
        $region30: #{lstm_forward_seq.3} parent=11 // pred_check_branch
          %288 = sbr.rel (%p286) target = $region32
        $region31: #{lstm_forward_seq.3} parent=11 // pred_region
          _
        $region32: #{lstm_forward_seq.3} parent=11 // pred_fallthru
          _
        // Predicated region
        $region33: #{lstm_forward_seq.3} parent=11 // pred_check
          %p289 = pneg %p173
        $region34: #{lstm_forward_seq.3} parent=11 // pred_check_branch
          %291 = sbr.rel (%p289) target = $region36
        $region35: #{lstm_forward_seq.3} parent=11 // pred_region
          _
        $region36: #{lstm_forward_seq.3} parent=11 // pred_fallthru
          _
      $region12: #{lstm_forward_seq.3} parent=5 // pred_fallthru
        _
      %p292 = scmp.lt.s32.totalorder %s21, 8
      // Predicated region
      $region37: #{lstm_forward_seq.3} parent=5 // pred_check
        %p293 = pneg %p292
      $region38: #{lstm_forward_seq.3} parent=5 // pred_check_branch
        %295 = sbr.rel (%p293) target = $region40
      $region39: #{lstm_forward_seq.3} parent=5 // pred_region
        // Predicated region
        $region41: #{lstm_forward_seq.3} parent=39 // pred_check
          %p296 = pneg %p41
        $region42: #{lstm_forward_seq.3} parent=39 // pred_check_branch
          %298 = sbr.rel (%p296) target = $region44
        $region43: #{lstm_forward_seq.3} parent=39 // pred_region
          %p299 = scmp.lt.s32.totalorder %s21, 7
          %s300 = scalar_select %p299, %s21, 7
          %s301 = smul.addr %s300, 4
          %s302 = smul.addr %s301, 8
          %s303 = scalar_lea.vmem %s0, %s302
        $region44: #{lstm_forward_seq.3} parent=39 // pred_fallthru
          _
      $region40: #{lstm_forward_seq.3} parent=5 // pred_fallthru
        _
      %p304 = scmp.le.s32.totalorder 1, %s21
      %p305 = scmp.lt.s32.totalorder %s21, 9
      %p306 = pnand %p304, %p305
      %p307 = pneg %p306
      // Predicated region
      $region45: #{lstm_forward_seq.3} parent=5 // pred_check
        _
      $region46: #{lstm_forward_seq.3} parent=5 // pred_check_branch
        %309 = sbr.rel (%p306) target = $region48
      $region47: #{lstm_forward_seq.3} parent=5 // pred_region
        %s310 = ssub.s32 %s21, 1
        // Predicated region
        $region49: #{lstm_forward_seq.3} parent=47 // pred_check
          %p311 = pneg %p68
        $region50: #{lstm_forward_seq.3} parent=47 // pred_check_branch
          %313 = sbr.rel (%p311) target = $region52
        $region51: #{lstm_forward_seq.3} parent=47 // pred_region
          %314 = dma.done [#allocation3], 4096
        $region52: #{lstm_forward_seq.3} parent=47 // pred_fallthru
          _
        // Predicated region
        $region53: #{lstm_forward_seq.3} parent=47 // pred_check
          %p315 = pneg %p110
        $region54: #{lstm_forward_seq.3} parent=47 // pred_check_branch
          %317 = sbr.rel (%p315) target = $region56
        $region55: #{lstm_forward_seq.3} parent=47 // pred_region
          %318 = dma.done [#allocation6], 144
        $region56: #{lstm_forward_seq.3} parent=47 // pred_fallthru
          _
        %p319 = scmp.lt.s32.totalorder %s26, 7
        %s320 = scalar_select %p319, %s26, 7
        %s321 = smul.addr %s320, 4
        %s322 = smul.addr %s321, 8
        %s323 = scalar_lea.vmem %s0, %s322
        %p324 = pneg %p47
        %p325 = pneg %p44
        %p326 = pneg %p68
        %p327 = pneg %p65
        %p328 = pneg %p89
        %p329 = pneg %p86
        %p330 = pneg %p110
        %p331 = pneg %p107
        %p332 = pneg %p131
        %p333 = pneg %p128
        %p334 = pneg %p152
        %p335 = pneg %p149
        %p336 = pneg %p173
        %p337 = pneg %p170
        %p338 = pneg %p199
        %p339 = pneg %p196
        %s340 = sand.u32 %s186, 1
        %s341 = scalar_lea.sflag [#allocation4], %s340
        %s342 = sand.u32 %s186, 1
        %s343 = smul.addr %s342, 8
        %s344 = scalar_lea.vmem [#allocation7], %s343
        %p345 = pneg %p220
        %p346 = pneg %p217
        %p347 = pneg %p241
        %p348 = pneg %p238
        %p349 = scmp.lt.s32.totalorder %s26, 7
        %s350 = scalar_select %p349, %s26, 7
        %s351 = smul.addr %s350, 4
        %s352 = smul.addr %s351, 8
        %s353 = scalar_lea.vmem %s0, %s352
        %p355 = scmp.eq.s32.totalorder %s26, 0
        // Predicated region
        $region57: #{lstm_forward_seq.3} parent=47 // pred_check
          %p356 = pneg %p355
        $region58: #{lstm_forward_seq.3} parent=47 // pred_check_branch
          %358 = sbr.rel (%p356) target = $region60
        $region59: #{lstm_forward_seq.3} parent=47 // pred_region
          %v359 = vld [vmem:[%s4] sm:$0xff]
          %v360 = vld [vmem:[%s4 + $0x8] sm:$0xff]
          %361 = vst [vmem:[%s8] sm:$0xff] %v359
          %362 = vst [vmem:[%s8 + $0x8] sm:$0xff] %v360
          %v363 = vld [vmem:[%s5] sm:$0xff]
          %v364 = vld [vmem:[%s5 + $0x8] sm:$0xff]
          %365 = vst [vmem:[%s9] sm:$0xff] %v363
          %366 = vst [vmem:[%s9 + $0x8] sm:$0xff] %v364
        $region60: #{lstm_forward_seq.3} parent=47 // pred_fallthru
          _
        %v367 = vld [vmem:[%s353] sm:$0xff]
        %v368 = vld [vmem:[%s353 + $0x8] sm:$0xff]
        %v369 = vld [vmem:[%s353 + $0x10] sm:$0xff]
        %v370 = vld [vmem:[%s353 + $0x18] sm:$0xff]
        %v371 = vld [vmem:[%s8] sm:$0xff]
        %v372 = vld [vmem:[%s9] sm:$0xff]
        %v373 = vpack.c.bf16 %v371, %v371
        %v374 = vld [vmem:[%s2] sm:$0xff]
        %v375 = vld [vmem:[%s2 + $0x8] sm:$0xff]
        %v376 = vld [vmem:[%s2 + $0x10] sm:$0xff]
        %v377 = vld [vmem:[%s2 + $0x18] sm:$0xff]
        %v378 = vld [vmem:[%s2 + $0x20] sm:$0xff]
        %v379 = vld [vmem:[%s2 + $0x28] sm:$0xff]
        %v380 = vld [vmem:[%s2 + $0x30] sm:$0xff]
        %v381 = vld [vmem:[%s2 + $0x38] sm:$0xff]
        %v382 = vld [vmem:[%s2 + $0x40] sm:$0xff]
        %v383 = vld [vmem:[%s2 + $0x48] sm:$0xff]
        %v384 = vld [vmem:[%s2 + $0x50] sm:$0xff]
        %v385 = vld [vmem:[%s2 + $0x58] sm:$0xff]
        %v386 = vld [vmem:[%s2 + $0x60] sm:$0xff]
        %v387 = vld [vmem:[%s2 + $0x68] sm:$0xff]
        %v388 = vld [vmem:[%s2 + $0x70] sm:$0xff]
        %v389 = vld [vmem:[%s2 + $0x78] sm:$0xff]
        %v390 = vld [vmem:[%s2 + $0x80] sm:$0xff]
        %v391 = vld [vmem:[%s2 + $0x88] sm:$0xff]
        %v392 = vld [vmem:[%s2 + $0x90] sm:$0xff]
        %v393 = vld [vmem:[%s2 + $0x98] sm:$0xff]
        %v394 = vld [vmem:[%s2 + $0xa0] sm:$0xff]
        %v395 = vld [vmem:[%s2 + $0xa8] sm:$0xff]
        %v396 = vld [vmem:[%s2 + $0xb0] sm:$0xff]
        %v397 = vld [vmem:[%s2 + $0xb8] sm:$0xff]
        %v398 = vld [vmem:[%s2 + $0xc0] sm:$0xff]
        %v399 = vld [vmem:[%s2 + $0xc8] sm:$0xff]
        %v400 = vld [vmem:[%s2 + $0xd0] sm:$0xff]
        %v401 = vld [vmem:[%s2 + $0xd8] sm:$0xff]
        %v402 = vld [vmem:[%s2 + $0xe0] sm:$0xff]
        %v403 = vld [vmem:[%s2 + $0xe8] sm:$0xff]
        %v404 = vld [vmem:[%s2 + $0xf0] sm:$0xff]
        %v405 = vld [vmem:[%s2 + $0xf8] sm:$0xff]
        %v438 = vunpack.c.l.b16 %v374
        %v439 = vunpack.c.h.b16 %v374
        %v440 = vunpack.c.l.b16 %v375
        %v441 = vunpack.c.h.b16 %v375
        %v442 = vunpack.c.l.b16 %v376
        %v443 = vunpack.c.h.b16 %v376
        %v444 = vunpack.c.l.b16 %v377
        %v445 = vunpack.c.h.b16 %v377
        %v446 = vunpack.c.l.b16 %v378
        %v447 = vunpack.c.h.b16 %v378
        %v448 = vunpack.c.l.b16 %v379
        %v449 = vunpack.c.h.b16 %v379
        %v450 = vunpack.c.l.b16 %v380
        %v451 = vunpack.c.h.b16 %v380
        %v452 = vunpack.c.l.b16 %v381
        %v453 = vunpack.c.h.b16 %v381
        %v454 = vunpack.c.l.b16 %v382
        %v455 = vunpack.c.h.b16 %v382
        %v456 = vunpack.c.l.b16 %v383
        %v457 = vunpack.c.h.b16 %v383
        %v458 = vunpack.c.l.b16 %v384
        %v459 = vunpack.c.h.b16 %v384
        %v460 = vunpack.c.l.b16 %v385
        %v461 = vunpack.c.h.b16 %v385
        %v462 = vunpack.c.l.b16 %v386
        %v463 = vunpack.c.h.b16 %v386
        %v464 = vunpack.c.l.b16 %v387
        %v465 = vunpack.c.h.b16 %v387
        %v466 = vunpack.c.l.b16 %v388
        %v467 = vunpack.c.h.b16 %v388
        %v468 = vunpack.c.l.b16 %v389
        %v469 = vunpack.c.h.b16 %v389
        %v470 = vunpack.c.l.b16 %v390
        %v471 = vunpack.c.h.b16 %v390
        %v472 = vunpack.c.l.b16 %v391
        %v473 = vunpack.c.h.b16 %v391
        %v474 = vunpack.c.l.b16 %v392
        %v475 = vunpack.c.h.b16 %v392
        %v476 = vunpack.c.l.b16 %v393
        %v477 = vunpack.c.h.b16 %v393
        %v478 = vunpack.c.l.b16 %v394
        %v479 = vunpack.c.h.b16 %v394
        %v480 = vunpack.c.l.b16 %v395
        %v481 = vunpack.c.h.b16 %v395
        %v482 = vunpack.c.l.b16 %v396
        %v483 = vunpack.c.h.b16 %v396
        %v484 = vunpack.c.l.b16 %v397
        %v485 = vunpack.c.h.b16 %v397
        %v486 = vunpack.c.l.b16 %v398
        %v487 = vunpack.c.h.b16 %v398
        %v488 = vunpack.c.l.b16 %v399
        %v489 = vunpack.c.h.b16 %v399
        %v490 = vunpack.c.l.b16 %v400
        %v491 = vunpack.c.h.b16 %v400
        %v492 = vunpack.c.l.b16 %v401
        %v493 = vunpack.c.h.b16 %v401
        %v494 = vunpack.c.l.b16 %v402
        %v495 = vunpack.c.h.b16 %v402
        %v496 = vunpack.c.l.b16 %v403
        %v497 = vunpack.c.h.b16 %v403
        %v498 = vunpack.c.l.b16 %v404
        %v499 = vunpack.c.h.b16 %v404
        %v500 = vunpack.c.l.b16 %v405
        %v501 = vunpack.c.h.b16 %v405
        %v502 = vpack.c.b16 %v442, %v438
        %v503 = vpack.c.b16 %v443, %v439
        %v504 = vpack.c.b16 %v444, %v440
        %v505 = vpack.c.b16 %v445, %v441
        %v506 = vpack.c.b16 %v450, %v446
        %v507 = vpack.c.b16 %v451, %v447
        %v508 = vpack.c.b16 %v452, %v448
        %v509 = vpack.c.b16 %v453, %v449
        %v510 = vpack.c.b16 %v458, %v454
        %v511 = vpack.c.b16 %v459, %v455
        %v512 = vpack.c.b16 %v460, %v456
        %v513 = vpack.c.b16 %v461, %v457
        %v514 = vpack.c.b16 %v466, %v462
        %v515 = vpack.c.b16 %v467, %v463
        %v516 = vpack.c.b16 %v468, %v464
        %v517 = vpack.c.b16 %v469, %v465
        %v518 = vpack.c.b16 %v474, %v470
        %v519 = vpack.c.b16 %v475, %v471
        %v520 = vpack.c.b16 %v476, %v472
        %v521 = vpack.c.b16 %v477, %v473
        %v522 = vpack.c.b16 %v482, %v478
        %v523 = vpack.c.b16 %v483, %v479
        %v524 = vpack.c.b16 %v484, %v480
        %v525 = vpack.c.b16 %v485, %v481
        %v526 = vpack.c.b16 %v490, %v486
        %v527 = vpack.c.b16 %v491, %v487
        %v528 = vpack.c.b16 %v492, %v488
        %v529 = vpack.c.b16 %v493, %v489
        %v530 = vpack.c.b16 %v498, %v494
        %v531 = vpack.c.b16 %v499, %v495
        %v532 = vpack.c.b16 %v500, %v496
        %v533 = vpack.c.b16 %v501, %v497
        %566 = vmatprep.subr.bf16.mxu0 %v503
        %567 = vmatpush1.bf16.msra.mxu0 %v502
        %568 = vmatprep.subr.bf16.mxu0 %v507
        %569 = vmatpush1.bf16.msra.mxu0 %v506
        %570 = vmatprep.subr.bf16.mxu0 %v511
        %571 = vmatpush1.bf16.msra.mxu0 %v510
        %572 = vmatprep.subr.bf16.mxu0 %v515
        %573 = vmatpush1.bf16.msra.mxu0 %v514
        %574 = vmatprep.subr.bf16.mxu0 %v519
        %575 = vmatpush1.bf16.msra.mxu0 %v518
        %576 = vmatprep.subr.bf16.mxu0 %v523
        %577 = vmatpush1.bf16.msra.mxu0 %v522
        %578 = vmatprep.subr.bf16.mxu0 %v527
        %579 = vmatpush1.bf16.msra.mxu0 %v526
        %580 = vmatprep.subr.bf16.mxu0 %v531
        %581 = vmatpush1.bf16.msra.mxu0 %v530
        %582 = vmatprep.subr.bf16.mxu0 0
        %583 = vmatpush1.bf16.msra.mxu0 0
        %584 = vmatprep.subr.bf16.mxu0 0
        %585 = vmatpush1.bf16.msra.mxu0 0
        %586 = vmatprep.subr.bf16.mxu0 0
        %587 = vmatpush1.bf16.msra.mxu0 0
        %588 = vmatprep.subr.bf16.mxu0 0
        %589 = vmatpush1.bf16.msra.mxu0 0
        %590 = vmatprep.subr.bf16.mxu0 0
        %591 = vmatpush1.bf16.msra.mxu0 0
        %592 = vmatprep.subr.bf16.mxu0 0
        %593 = vmatpush1.bf16.msra.mxu0 0
        %594 = vmatprep.subr.bf16.mxu0 0
        %595 = vmatpush1.bf16.msra.mxu0 0
        %596 = vmatprep.subr.bf16.mxu0 0
        %597 = vmatpush1.bf16.msra.mxu0 0
        %598 = vmatprep.mubr.bf16.mxu0 0
        %599 = vmatmul.mubr.bf16.gmra.mrb[0].mxu0 %v373
        %v600 = vpop.f32.mrb[0].mxu0
        %v601 = vadd.f32 0.0, %v600
        %v602 = vpop.f32.mrb[0].mxu0
        %v603 = vadd.f32 0.0, %v602
        %v604 = vpop.f32.mrb[0].mxu0
        %v605 = vpop.f32.mrb[0].mxu0
        %606 = vdwg.mxu0
        %607 = vmatprep.subr.bf16.mxu0 %v505
        %608 = vmatpush1.bf16.msra.mxu0 %v504
        %609 = vmatprep.subr.bf16.mxu0 %v509
        %610 = vmatpush1.bf16.msra.mxu0 %v508
        %611 = vmatprep.subr.bf16.mxu0 %v513
        %612 = vmatpush1.bf16.msra.mxu0 %v512
        %613 = vmatprep.subr.bf16.mxu0 %v517
        %614 = vmatpush1.bf16.msra.mxu0 %v516
        %615 = vmatprep.subr.bf16.mxu0 %v521
        %616 = vmatpush1.bf16.msra.mxu0 %v520
        %617 = vmatprep.subr.bf16.mxu0 %v525
        %618 = vmatpush1.bf16.msra.mxu0 %v524
        %619 = vmatprep.subr.bf16.mxu0 %v529
        %620 = vmatpush1.bf16.msra.mxu0 %v528
        %621 = vmatprep.subr.bf16.mxu0 %v533
        %622 = vmatpush1.bf16.msra.mxu0 %v532
        %623 = vmatprep.subr.bf16.mxu0 0
        %624 = vmatpush1.bf16.msra.mxu0 0
        %625 = vmatprep.subr.bf16.mxu0 0
        %626 = vmatpush1.bf16.msra.mxu0 0
        %627 = vmatprep.subr.bf16.mxu0 0
        %628 = vmatpush1.bf16.msra.mxu0 0
        %629 = vmatprep.subr.bf16.mxu0 0
        %630 = vmatpush1.bf16.msra.mxu0 0
        %631 = vmatprep.subr.bf16.mxu0 0
        %632 = vmatpush1.bf16.msra.mxu0 0
        %633 = vmatprep.subr.bf16.mxu0 0
        %634 = vmatpush1.bf16.msra.mxu0 0
        %635 = vmatprep.subr.bf16.mxu0 0
        %636 = vmatpush1.bf16.msra.mxu0 0
        %637 = vmatprep.subr.bf16.mxu0 0
        %638 = vmatpush1.bf16.msra.mxu0 0
        %639 = vmatprep.mubr.bf16.mxu0 0
        %640 = vmatmul.mubr.bf16.gmra.mrb[0].mxu0 %v373
        %v641 = vpop.f32.mrb[0].mxu0
        %v642 = vadd.f32 0.0, %v641
        %v643 = vpop.f32.mrb[0].mxu0
        %v644 = vadd.f32 0.0, %v643
        %v645 = vpop.f32.mrb[0].mxu0
        %v646 = vpop.f32.mrb[0].mxu0
        %647 = vdwg.mxu0
        %v648 = vadd.f32 %v367, %v601
        %v649 = vadd.f32 %v368, %v603
        %v650 = vadd.f32 %v369, %v642
        %v651 = vadd.f32 %v370, %v644
        %v652 = vld [vmem:[#allocation5] sm:$0xf]
        %v654 = vlaneseq
        %v655 = vshrl.u32 %v654, 7
        %v656 = vsub.s32 0, %v655
        %v657 = vrot.slane %v652, %v656
        %v658 = vlaneseq
        %v659 = vshrl.u32 %v658, 7
        %v660 = vsub.s32 1, %v659
        %v661 = vrot.slane %v652, %v660
        %v662 = vlaneseq
        %v663 = vshrl.u32 %v662, 7
        %v664 = vsub.s32 2, %v663
        %v665 = vrot.slane %v652, %v664
        %v666 = vlaneseq
        %v667 = vshrl.u32 %v666, 7
        %v668 = vsub.s32 3, %v667
        %v669 = vrot.slane %v652, %v668
        %v674 = vadd.f32 %v648, %v657
        %v675 = vadd.f32 %v649, %v661
        %v676 = vadd.f32 %v650, %v665
        %v677 = vadd.f32 %v651, %v669
        %v678 = vxor.u32 %v674, 2147483648
        %v679 = vxor.u32 %v675, 2147483648
        %v680 = vxor.u32 %v676, 2147483648
        %v681 = vmul.f32 %v678, 1.442695
        %v682 = vpow.pop %v681
        %v683 = vmul.f32 %v679, 1.442695
        %v684 = vpow.pop %v683
        %v685 = vmul.f32 %v680, 1.442695
        %v686 = vpow.pop %v685
        %v687 = vadd.f32 %v682, 1.0
        %v688 = vadd.f32 %v684, 1.0
        %v689 = vadd.f32 %v686, 1.0
        %v690 = vrcp.pop %v687
        %v691 = vmul.f32 1.0, %v690
        %v692 = vrcp.pop %v688
        %v693 = vmul.f32 1.0, %v692
        %v694 = vrcp.pop %v689
        %v695 = vmul.f32 1.0, %v694
        %v696 = vtanh.pop %v677
        %v697 = vmul.f32 %v693, %v372
        %v698 = vmul.f32 %v691, %v696
        %v699 = vadd.f32 %v697, %v698
        %v700 = vtanh.pop %v699
        %v701 = vmul.f32 %v695, %v700
        %702 = vst [vmem:[%s8] sm:$0xff] %v701
        %703 = vst [vmem:[%s9] sm:$0xff] %v699
        %v704 = vpack.c.bf16 %v701, %v701
        %v705 = vld [vmem:[#allocation2] sm:$0xff]
        %v706 = vld [vmem:[#allocation2 + $0x8] sm:$0xff]
        %v707 = vld [vmem:[#allocation2 + $0x10] sm:$0xff]
        %v708 = vld [vmem:[#allocation2 + $0x18] sm:$0xff]
        %v709 = vld [vmem:[#allocation2 + $0x20] sm:$0xff]
        %v710 = vld [vmem:[#allocation2 + $0x28] sm:$0xff]
        %v711 = vld [vmem:[#allocation2 + $0x30] sm:$0xff]
        %v712 = vld [vmem:[#allocation2 + $0x38] sm:$0xff]
        %v713 = vld [vmem:[#allocation2 + $0x40] sm:$0xff]
        %v714 = vld [vmem:[#allocation2 + $0x48] sm:$0xff]
        %v715 = vld [vmem:[#allocation2 + $0x50] sm:$0xff]
        %v716 = vld [vmem:[#allocation2 + $0x58] sm:$0xff]
        %v717 = vld [vmem:[#allocation2 + $0x60] sm:$0xff]
        %v718 = vld [vmem:[#allocation2 + $0x68] sm:$0xff]
        %v719 = vld [vmem:[#allocation2 + $0x70] sm:$0xff]
        %v720 = vld [vmem:[#allocation2 + $0x78] sm:$0xff]
        %v721 = vld [vmem:[#allocation2 + $0x80] sm:$0xff]
        %v722 = vld [vmem:[#allocation2 + $0x88] sm:$0xff]
        %v723 = vld [vmem:[#allocation2 + $0x90] sm:$0xff]
        %v724 = vld [vmem:[#allocation2 + $0x98] sm:$0xff]
        %v725 = vld [vmem:[#allocation2 + $0xa0] sm:$0xff]
        %v726 = vld [vmem:[#allocation2 + $0xa8] sm:$0xff]
        %v727 = vld [vmem:[#allocation2 + $0xb0] sm:$0xff]
        %v728 = vld [vmem:[#allocation2 + $0xb8] sm:$0xff]
        %v729 = vld [vmem:[#allocation2 + $0xc0] sm:$0xff]
        %v730 = vld [vmem:[#allocation2 + $0xc8] sm:$0xff]
        %v731 = vld [vmem:[#allocation2 + $0xd0] sm:$0xff]
        %v732 = vld [vmem:[#allocation2 + $0xd8] sm:$0xff]
        %v733 = vld [vmem:[#allocation2 + $0xe0] sm:$0xff]
        %v734 = vld [vmem:[#allocation2 + $0xe8] sm:$0xff]
        %v735 = vld [vmem:[#allocation2 + $0xf0] sm:$0xff]
        %v736 = vld [vmem:[#allocation2 + $0xf8] sm:$0xff]
        %s737 = scalar_lea.vmem %s8, 8
        %v738 = vld [vmem:[%s737] sm:$0xff]
        %s739 = scalar_lea.vmem %s9, 8
        %v740 = vld [vmem:[%s739] sm:$0xff]
        %v741 = vpack.c.bf16 %v738, %v738
        %s742 = scalar_lea.vmem %s2, 256
        %v743 = vld [vmem:[%s742] sm:$0xff]
        %v744 = vld [vmem:[%s742 + $0x8] sm:$0xff]
        %v745 = vld [vmem:[%s742 + $0x10] sm:$0xff]
        %v746 = vld [vmem:[%s742 + $0x18] sm:$0xff]
        %v747 = vld [vmem:[%s742 + $0x20] sm:$0xff]
        %v748 = vld [vmem:[%s742 + $0x28] sm:$0xff]
        %v749 = vld [vmem:[%s742 + $0x30] sm:$0xff]
        %v750 = vld [vmem:[%s742 + $0x38] sm:$0xff]
        %v751 = vld [vmem:[%s742 + $0x40] sm:$0xff]
        %v752 = vld [vmem:[%s742 + $0x48] sm:$0xff]
        %v753 = vld [vmem:[%s742 + $0x50] sm:$0xff]
        %v754 = vld [vmem:[%s742 + $0x58] sm:$0xff]
        %v755 = vld [vmem:[%s742 + $0x60] sm:$0xff]
        %v756 = vld [vmem:[%s742 + $0x68] sm:$0xff]
        %v757 = vld [vmem:[%s742 + $0x70] sm:$0xff]
        %v758 = vld [vmem:[%s742 + $0x78] sm:$0xff]
        %v759 = vld [vmem:[%s742 + $0x80] sm:$0xff]
        %v760 = vld [vmem:[%s742 + $0x88] sm:$0xff]
        %v761 = vld [vmem:[%s742 + $0x90] sm:$0xff]
        %v762 = vld [vmem:[%s742 + $0x98] sm:$0xff]
        %v763 = vld [vmem:[%s742 + $0xa0] sm:$0xff]
        %v764 = vld [vmem:[%s742 + $0xa8] sm:$0xff]
        %v765 = vld [vmem:[%s742 + $0xb0] sm:$0xff]
        %v766 = vld [vmem:[%s742 + $0xb8] sm:$0xff]
        %v767 = vld [vmem:[%s742 + $0xc0] sm:$0xff]
        %v768 = vld [vmem:[%s742 + $0xc8] sm:$0xff]
        %v769 = vld [vmem:[%s742 + $0xd0] sm:$0xff]
        %v770 = vld [vmem:[%s742 + $0xd8] sm:$0xff]
        %v771 = vld [vmem:[%s742 + $0xe0] sm:$0xff]
        %v772 = vld [vmem:[%s742 + $0xe8] sm:$0xff]
        %v773 = vld [vmem:[%s742 + $0xf0] sm:$0xff]
        %v774 = vld [vmem:[%s742 + $0xf8] sm:$0xff]
        %v807 = vunpack.c.l.b16 %v743
        %v808 = vunpack.c.h.b16 %v743
        %v809 = vunpack.c.l.b16 %v744
        %v810 = vunpack.c.h.b16 %v744
        %v811 = vunpack.c.l.b16 %v745
        %v812 = vunpack.c.h.b16 %v745
        %v813 = vunpack.c.l.b16 %v746
        %v814 = vunpack.c.h.b16 %v746
        %v815 = vunpack.c.l.b16 %v747
        %v816 = vunpack.c.h.b16 %v747
        %v817 = vunpack.c.l.b16 %v748
        %v818 = vunpack.c.h.b16 %v748
        %v819 = vunpack.c.l.b16 %v749
        %v820 = vunpack.c.h.b16 %v749
        %v821 = vunpack.c.l.b16 %v750
        %v822 = vunpack.c.h.b16 %v750
        %v823 = vunpack.c.l.b16 %v751
        %v824 = vunpack.c.h.b16 %v751
        %v825 = vunpack.c.l.b16 %v752
        %v826 = vunpack.c.h.b16 %v752
        %v827 = vunpack.c.l.b16 %v753
        %v828 = vunpack.c.h.b16 %v753
        %v829 = vunpack.c.l.b16 %v754
        %v830 = vunpack.c.h.b16 %v754
        %v831 = vunpack.c.l.b16 %v755
        %v832 = vunpack.c.h.b16 %v755
        %v833 = vunpack.c.l.b16 %v756
        %v834 = vunpack.c.h.b16 %v756
        %v835 = vunpack.c.l.b16 %v757
        %v836 = vunpack.c.h.b16 %v757
        %v837 = vunpack.c.l.b16 %v758
        %v838 = vunpack.c.h.b16 %v758
        %v839 = vunpack.c.l.b16 %v759
        %v840 = vunpack.c.h.b16 %v759
        %v841 = vunpack.c.l.b16 %v760
        %v842 = vunpack.c.h.b16 %v760
        %v843 = vunpack.c.l.b16 %v761
        %v844 = vunpack.c.h.b16 %v761
        %v845 = vunpack.c.l.b16 %v762
        %v846 = vunpack.c.h.b16 %v762
        %v847 = vunpack.c.l.b16 %v763
        %v848 = vunpack.c.h.b16 %v763
        %v849 = vunpack.c.l.b16 %v764
        %v850 = vunpack.c.h.b16 %v764
        %v851 = vunpack.c.l.b16 %v765
        %v852 = vunpack.c.h.b16 %v765
        %v853 = vunpack.c.l.b16 %v766
        %v854 = vunpack.c.h.b16 %v766
        %v855 = vunpack.c.l.b16 %v767
        %v856 = vunpack.c.h.b16 %v767
        %v857 = vunpack.c.l.b16 %v768
        %v858 = vunpack.c.h.b16 %v768
        %v859 = vunpack.c.l.b16 %v769
        %v860 = vunpack.c.h.b16 %v769
        %v861 = vunpack.c.l.b16 %v770
        %v862 = vunpack.c.h.b16 %v770
        %v863 = vunpack.c.l.b16 %v771
        %v864 = vunpack.c.h.b16 %v771
        %v865 = vunpack.c.l.b16 %v772
        %v866 = vunpack.c.h.b16 %v772
        %v867 = vunpack.c.l.b16 %v773
        %v868 = vunpack.c.h.b16 %v773
        %v869 = vunpack.c.l.b16 %v774
        %v870 = vunpack.c.h.b16 %v774
        %v871 = vpack.c.b16 %v811, %v807
        %v872 = vpack.c.b16 %v812, %v808
        %v873 = vpack.c.b16 %v813, %v809
        %v874 = vpack.c.b16 %v814, %v810
        %v875 = vpack.c.b16 %v819, %v815
        %v876 = vpack.c.b16 %v820, %v816
        %v877 = vpack.c.b16 %v821, %v817
        %v878 = vpack.c.b16 %v822, %v818
        %v879 = vpack.c.b16 %v827, %v823
        %v880 = vpack.c.b16 %v828, %v824
        %v881 = vpack.c.b16 %v829, %v825
        %v882 = vpack.c.b16 %v830, %v826
        %v883 = vpack.c.b16 %v835, %v831
        %v884 = vpack.c.b16 %v836, %v832
        %v885 = vpack.c.b16 %v837, %v833
        %v886 = vpack.c.b16 %v838, %v834
        %v887 = vpack.c.b16 %v843, %v839
        %v888 = vpack.c.b16 %v844, %v840
        %v889 = vpack.c.b16 %v845, %v841
        %v890 = vpack.c.b16 %v846, %v842
        %v891 = vpack.c.b16 %v851, %v847
        %v892 = vpack.c.b16 %v852, %v848
        %v893 = vpack.c.b16 %v853, %v849
        %v894 = vpack.c.b16 %v854, %v850
        %v895 = vpack.c.b16 %v859, %v855
        %v896 = vpack.c.b16 %v860, %v856
        %v897 = vpack.c.b16 %v861, %v857
        %v898 = vpack.c.b16 %v862, %v858
        %v899 = vpack.c.b16 %v867, %v863
        %v900 = vpack.c.b16 %v868, %v864
        %v901 = vpack.c.b16 %v869, %v865
        %v902 = vpack.c.b16 %v870, %v866
        %935 = vmatprep.subr.bf16.mxu0 %v872
        %936 = vmatpush1.bf16.msra.mxu0 %v871
        %937 = vmatprep.subr.bf16.mxu0 %v876
        %938 = vmatpush1.bf16.msra.mxu0 %v875
        %939 = vmatprep.subr.bf16.mxu0 %v880
        %940 = vmatpush1.bf16.msra.mxu0 %v879
        %941 = vmatprep.subr.bf16.mxu0 %v884
        %942 = vmatpush1.bf16.msra.mxu0 %v883
        %943 = vmatprep.subr.bf16.mxu0 %v888
        %944 = vmatpush1.bf16.msra.mxu0 %v887
        %945 = vmatprep.subr.bf16.mxu0 %v892
        %946 = vmatpush1.bf16.msra.mxu0 %v891
        %947 = vmatprep.subr.bf16.mxu0 %v896
        %948 = vmatpush1.bf16.msra.mxu0 %v895
        %949 = vmatprep.subr.bf16.mxu0 %v900
        %950 = vmatpush1.bf16.msra.mxu0 %v899
        %951 = vmatprep.subr.bf16.mxu0 0
        %952 = vmatpush1.bf16.msra.mxu0 0
        %953 = vmatprep.subr.bf16.mxu0 0
        %954 = vmatpush1.bf16.msra.mxu0 0
        %955 = vmatprep.subr.bf16.mxu0 0
        %956 = vmatpush1.bf16.msra.mxu0 0
        %957 = vmatprep.subr.bf16.mxu0 0
        %958 = vmatpush1.bf16.msra.mxu0 0
        %959 = vmatprep.subr.bf16.mxu0 0
        %960 = vmatpush1.bf16.msra.mxu0 0
        %961 = vmatprep.subr.bf16.mxu0 0
        %962 = vmatpush1.bf16.msra.mxu0 0
        %963 = vmatprep.subr.bf16.mxu0 0
        %964 = vmatpush1.bf16.msra.mxu0 0
        %965 = vmatprep.subr.bf16.mxu0 0
        %966 = vmatpush1.bf16.msra.mxu0 0
        %967 = vmatprep.mubr.bf16.mxu0 0
        %968 = vmatmul.mubr.bf16.gmra.mrb[0].mxu0 %v741
        %v969 = vpop.f32.mrb[0].mxu0
        %v970 = vadd.f32 0.0, %v969
        %v971 = vpop.f32.mrb[0].mxu0
        %v972 = vadd.f32 0.0, %v971
        %v973 = vpop.f32.mrb[0].mxu0
        %v974 = vpop.f32.mrb[0].mxu0
        %975 = vdwg.mxu0
        %976 = vmatprep.subr.bf16.mxu0 %v874
        %977 = vmatpush1.bf16.msra.mxu0 %v873
        %978 = vmatprep.subr.bf16.mxu0 %v878
        %979 = vmatpush1.bf16.msra.mxu0 %v877
        %980 = vmatprep.subr.bf16.mxu0 %v882
        %981 = vmatpush1.bf16.msra.mxu0 %v881
        %982 = vmatprep.subr.bf16.mxu0 %v886
        %983 = vmatpush1.bf16.msra.mxu0 %v885
        %984 = vmatprep.subr.bf16.mxu0 %v890
        %985 = vmatpush1.bf16.msra.mxu0 %v889
        %986 = vmatprep.subr.bf16.mxu0 %v894
        %987 = vmatpush1.bf16.msra.mxu0 %v893
        %988 = vmatprep.subr.bf16.mxu0 %v898
        %989 = vmatpush1.bf16.msra.mxu0 %v897
        %990 = vmatprep.subr.bf16.mxu0 %v902
        %991 = vmatpush1.bf16.msra.mxu0 %v901
        %992 = vmatprep.subr.bf16.mxu0 0
        %993 = vmatpush1.bf16.msra.mxu0 0
        %994 = vmatprep.subr.bf16.mxu0 0
        %995 = vmatpush1.bf16.msra.mxu0 0
        %996 = vmatprep.subr.bf16.mxu0 0
        %997 = vmatpush1.bf16.msra.mxu0 0
        %998 = vmatprep.subr.bf16.mxu0 0
        %999 = vmatpush1.bf16.msra.mxu0 0
        %1000 = vmatprep.subr.bf16.mxu0 0
        %1001 = vmatpush1.bf16.msra.mxu0 0
        %1002 = vmatprep.subr.bf16.mxu0 0
        %1003 = vmatpush1.bf16.msra.mxu0 0
        %1004 = vmatprep.subr.bf16.mxu0 0
        %1005 = vmatpush1.bf16.msra.mxu0 0
        %1006 = vmatprep.subr.bf16.mxu0 0
        %1007 = vmatpush1.bf16.msra.mxu0 0
        %1008 = vmatprep.mubr.bf16.mxu0 0
        %1009 = vmatmul.mubr.bf16.gmra.mrb[0].mxu0 %v741
        %v1010 = vpop.f32.mrb[0].mxu0
        %v1011 = vadd.f32 0.0, %v1010
        %v1012 = vpop.f32.mrb[0].mxu0
        %v1013 = vadd.f32 0.0, %v1012
        %v1014 = vpop.f32.mrb[0].mxu0
        %v1015 = vpop.f32.mrb[0].mxu0
        %1016 = vdwg.mxu0
        %v1049 = vunpack.c.l.b16 %v705
        %v1050 = vunpack.c.h.b16 %v705
        %v1051 = vunpack.c.l.b16 %v706
        %v1052 = vunpack.c.h.b16 %v706
        %v1053 = vunpack.c.l.b16 %v707
        %v1054 = vunpack.c.h.b16 %v707
        %v1055 = vunpack.c.l.b16 %v708
        %v1056 = vunpack.c.h.b16 %v708
        %v1057 = vunpack.c.l.b16 %v709
        %v1058 = vunpack.c.h.b16 %v709
        %v1059 = vunpack.c.l.b16 %v710
        %v1060 = vunpack.c.h.b16 %v710
        %v1061 = vunpack.c.l.b16 %v711
        %v1062 = vunpack.c.h.b16 %v711
        %v1063 = vunpack.c.l.b16 %v712
        %v1064 = vunpack.c.h.b16 %v712
        %v1065 = vunpack.c.l.b16 %v713
        %v1066 = vunpack.c.h.b16 %v713
        %v1067 = vunpack.c.l.b16 %v714
        %v1068 = vunpack.c.h.b16 %v714
        %v1069 = vunpack.c.l.b16 %v715
        %v1070 = vunpack.c.h.b16 %v715
        %v1071 = vunpack.c.l.b16 %v716
        %v1072 = vunpack.c.h.b16 %v716
        %v1073 = vunpack.c.l.b16 %v717
        %v1074 = vunpack.c.h.b16 %v717
        %v1075 = vunpack.c.l.b16 %v718
        %v1076 = vunpack.c.h.b16 %v718
        %v1077 = vunpack.c.l.b16 %v719
        %v1078 = vunpack.c.h.b16 %v719
        %v1079 = vunpack.c.l.b16 %v720
        %v1080 = vunpack.c.h.b16 %v720
        %v1081 = vunpack.c.l.b16 %v721
        %v1082 = vunpack.c.h.b16 %v721
        %v1083 = vunpack.c.l.b16 %v722
        %v1084 = vunpack.c.h.b16 %v722
        %v1085 = vunpack.c.l.b16 %v723
        %v1086 = vunpack.c.h.b16 %v723
        %v1087 = vunpack.c.l.b16 %v724
        %v1088 = vunpack.c.h.b16 %v724
        %v1089 = vunpack.c.l.b16 %v725
        %v1090 = vunpack.c.h.b16 %v725
        %v1091 = vunpack.c.l.b16 %v726
        %v1092 = vunpack.c.h.b16 %v726
        %v1093 = vunpack.c.l.b16 %v727
        %v1094 = vunpack.c.h.b16 %v727
        %v1095 = vunpack.c.l.b16 %v728
        %v1096 = vunpack.c.h.b16 %v728
        %v1097 = vunpack.c.l.b16 %v729
        %v1098 = vunpack.c.h.b16 %v729
        %v1099 = vunpack.c.l.b16 %v730
        %v1100 = vunpack.c.h.b16 %v730
        %v1101 = vunpack.c.l.b16 %v731
        %v1102 = vunpack.c.h.b16 %v731
        %v1103 = vunpack.c.l.b16 %v732
        %v1104 = vunpack.c.h.b16 %v732
        %v1105 = vunpack.c.l.b16 %v733
        %v1106 = vunpack.c.h.b16 %v733
        %v1107 = vunpack.c.l.b16 %v734
        %v1108 = vunpack.c.h.b16 %v734
        %v1109 = vunpack.c.l.b16 %v735
        %v1110 = vunpack.c.h.b16 %v735
        %v1111 = vunpack.c.l.b16 %v736
        %v1112 = vunpack.c.h.b16 %v736
        %v1113 = vpack.c.b16 %v1053, %v1049
        %v1114 = vpack.c.b16 %v1054, %v1050
        %v1115 = vpack.c.b16 %v1055, %v1051
        %v1116 = vpack.c.b16 %v1056, %v1052
        %v1117 = vpack.c.b16 %v1061, %v1057
        %v1118 = vpack.c.b16 %v1062, %v1058
        %v1119 = vpack.c.b16 %v1063, %v1059
        %v1120 = vpack.c.b16 %v1064, %v1060
        %v1121 = vpack.c.b16 %v1069, %v1065
        %v1122 = vpack.c.b16 %v1070, %v1066
        %v1123 = vpack.c.b16 %v1071, %v1067
        %v1124 = vpack.c.b16 %v1072, %v1068
        %v1125 = vpack.c.b16 %v1077, %v1073
        %v1126 = vpack.c.b16 %v1078, %v1074
        %v1127 = vpack.c.b16 %v1079, %v1075
        %v1128 = vpack.c.b16 %v1080, %v1076
        %v1129 = vpack.c.b16 %v1085, %v1081
        %v1130 = vpack.c.b16 %v1086, %v1082
        %v1131 = vpack.c.b16 %v1087, %v1083
        %v1132 = vpack.c.b16 %v1088, %v1084
        %v1133 = vpack.c.b16 %v1093, %v1089
        %v1134 = vpack.c.b16 %v1094, %v1090
        %v1135 = vpack.c.b16 %v1095, %v1091
        %v1136 = vpack.c.b16 %v1096, %v1092
        %v1137 = vpack.c.b16 %v1101, %v1097
        %v1138 = vpack.c.b16 %v1102, %v1098
        %v1139 = vpack.c.b16 %v1103, %v1099
        %v1140 = vpack.c.b16 %v1104, %v1100
        %v1141 = vpack.c.b16 %v1109, %v1105
        %v1142 = vpack.c.b16 %v1110, %v1106
        %v1143 = vpack.c.b16 %v1111, %v1107
        %v1144 = vpack.c.b16 %v1112, %v1108
        %1177 = vmatprep.subr.bf16.mxu0 %v1114
        %1178 = vmatpush1.bf16.msra.mxu0 %v1113
        %1179 = vmatprep.subr.bf16.mxu0 %v1118
        %1180 = vmatpush1.bf16.msra.mxu0 %v1117
        %1181 = vmatprep.subr.bf16.mxu0 %v1122
        %1182 = vmatpush1.bf16.msra.mxu0 %v1121
        %1183 = vmatprep.subr.bf16.mxu0 %v1126
        %1184 = vmatpush1.bf16.msra.mxu0 %v1125
        %1185 = vmatprep.subr.bf16.mxu0 %v1130
        %1186 = vmatpush1.bf16.msra.mxu0 %v1129
        %1187 = vmatprep.subr.bf16.mxu0 %v1134
        %1188 = vmatpush1.bf16.msra.mxu0 %v1133
        %1189 = vmatprep.subr.bf16.mxu0 %v1138
        %1190 = vmatpush1.bf16.msra.mxu0 %v1137
        %1191 = vmatprep.subr.bf16.mxu0 %v1142
        %1192 = vmatpush1.bf16.msra.mxu0 %v1141
        %1193 = vmatprep.subr.bf16.mxu0 0
        %1194 = vmatpush1.bf16.msra.mxu0 0
        %1195 = vmatprep.subr.bf16.mxu0 0
        %1196 = vmatpush1.bf16.msra.mxu0 0
        %1197 = vmatprep.subr.bf16.mxu0 0
        %1198 = vmatpush1.bf16.msra.mxu0 0
        %1199 = vmatprep.subr.bf16.mxu0 0
        %1200 = vmatpush1.bf16.msra.mxu0 0
        %1201 = vmatprep.subr.bf16.mxu0 0
        %1202 = vmatpush1.bf16.msra.mxu0 0
        %1203 = vmatprep.subr.bf16.mxu0 0
        %1204 = vmatpush1.bf16.msra.mxu0 0
        %1205 = vmatprep.subr.bf16.mxu0 0
        %1206 = vmatpush1.bf16.msra.mxu0 0
        %1207 = vmatprep.subr.bf16.mxu0 0
        %1208 = vmatpush1.bf16.msra.mxu0 0
        %1209 = vmatprep.mubr.bf16.mxu0 0
        %1210 = vmatmul.mubr.bf16.gmra.mrb[0].mxu0 %v704
        %v1211 = vpop.f32.mrb[0].mxu0
        %v1212 = vadd.f32 %v970, %v1211
        %v1213 = vpop.f32.mrb[0].mxu0
        %v1214 = vadd.f32 %v972, %v1213
        %v1215 = vpop.f32.mrb[0].mxu0
        %v1216 = vpop.f32.mrb[0].mxu0
        %1217 = vdwg.mxu0
        %1218 = vmatprep.subr.bf16.mxu0 %v1116
        %1219 = vmatpush1.bf16.msra.mxu0 %v1115
        %1220 = vmatprep.subr.bf16.mxu0 %v1120
        %1221 = vmatpush1.bf16.msra.mxu0 %v1119
        %1222 = vmatprep.subr.bf16.mxu0 %v1124
        %1223 = vmatpush1.bf16.msra.mxu0 %v1123
        %1224 = vmatprep.subr.bf16.mxu0 %v1128
        %1225 = vmatpush1.bf16.msra.mxu0 %v1127
        %1226 = vmatprep.subr.bf16.mxu0 %v1132
        %1227 = vmatpush1.bf16.msra.mxu0 %v1131
        %1228 = vmatprep.subr.bf16.mxu0 %v1136
        %1229 = vmatpush1.bf16.msra.mxu0 %v1135
        %1230 = vmatprep.subr.bf16.mxu0 %v1140
        %1231 = vmatpush1.bf16.msra.mxu0 %v1139
        %1232 = vmatprep.subr.bf16.mxu0 %v1144
        %1233 = vmatpush1.bf16.msra.mxu0 %v1143
        %1234 = vmatprep.subr.bf16.mxu0 0
        %1235 = vmatpush1.bf16.msra.mxu0 0
        %1236 = vmatprep.subr.bf16.mxu0 0
        %1237 = vmatpush1.bf16.msra.mxu0 0
        %1238 = vmatprep.subr.bf16.mxu0 0
        %1239 = vmatpush1.bf16.msra.mxu0 0
        %1240 = vmatprep.subr.bf16.mxu0 0
        %1241 = vmatpush1.bf16.msra.mxu0 0
        %1242 = vmatprep.subr.bf16.mxu0 0
        %1243 = vmatpush1.bf16.msra.mxu0 0
        %1244 = vmatprep.subr.bf16.mxu0 0
        %1245 = vmatpush1.bf16.msra.mxu0 0
        %1246 = vmatprep.subr.bf16.mxu0 0
        %1247 = vmatpush1.bf16.msra.mxu0 0
        %1248 = vmatprep.subr.bf16.mxu0 0
        %1249 = vmatpush1.bf16.msra.mxu0 0
        %1250 = vmatprep.mubr.bf16.mxu0 0
        %1251 = vmatmul.mubr.bf16.gmra.mrb[0].mxu0 %v704
        %v1252 = vpop.f32.mrb[0].mxu0
        %v1253 = vadd.f32 %v1011, %v1252
        %v1254 = vpop.f32.mrb[0].mxu0
        %v1255 = vadd.f32 %v1013, %v1254
        %v1256 = vpop.f32.mrb[0].mxu0
        %v1257 = vpop.f32.mrb[0].mxu0
        %1258 = vdwg.mxu0
        %v1259 = vld [vmem:[#allocation5 + $0x4] sm:$0xf]
        %v1261 = vlaneseq
        %v1262 = vshrl.u32 %v1261, 7
        %v1263 = vsub.s32 0, %v1262
        %v1264 = vrot.slane %v1259, %v1263
        %v1265 = vlaneseq
        %v1266 = vshrl.u32 %v1265, 7
        %v1267 = vsub.s32 1, %v1266
        %v1268 = vrot.slane %v1259, %v1267
        %v1269 = vlaneseq
        %v1270 = vshrl.u32 %v1269, 7
        %v1271 = vsub.s32 2, %v1270
        %v1272 = vrot.slane %v1259, %v1271
        %v1273 = vlaneseq
        %v1274 = vshrl.u32 %v1273, 7
        %v1275 = vsub.s32 3, %v1274
        %v1276 = vrot.slane %v1259, %v1275
        %v1281 = vadd.f32 %v1212, %v1264
        %v1282 = vadd.f32 %v1214, %v1268
        %v1283 = vadd.f32 %v1253, %v1272
        %v1284 = vadd.f32 %v1255, %v1276
        %v1285 = vxor.u32 %v1281, 2147483648
        %v1286 = vxor.u32 %v1282, 2147483648
        %v1287 = vxor.u32 %v1283, 2147483648
        %v1288 = vmul.f32 %v1285, 1.442695
        %v1289 = vpow.pop %v1288
        %v1290 = vmul.f32 %v1286, 1.442695
        %v1291 = vpow.pop %v1290
        %v1292 = vmul.f32 %v1287, 1.442695
        %v1293 = vpow.pop %v1292
        %v1294 = vadd.f32 %v1289, 1.0
        %v1295 = vadd.f32 %v1291, 1.0
        %v1296 = vadd.f32 %v1293, 1.0
        %v1297 = vrcp.pop %v1294
        %v1298 = vmul.f32 1.0, %v1297
        %v1299 = vrcp.pop %v1295
        %v1300 = vmul.f32 1.0, %v1299
        %v1301 = vrcp.pop %v1296
        %v1302 = vmul.f32 1.0, %v1301
        %v1303 = vtanh.pop %v1284
        %v1304 = vmul.f32 %v1300, %v740
        %v1305 = vmul.f32 %v1298, %v1303
        %v1306 = vadd.f32 %v1304, %v1305
        %v1307 = vtanh.pop %v1306
        %v1308 = vmul.f32 %v1302, %v1307
        %1309 = vst [vmem:[%s737] sm:$0xff] %v1308
        %1310 = vst [vmem:[%s739] sm:$0xff] %v1306
        %v1311 = vpack.c.bf16 %v1308, %v1308
        %v1312 = vld [vmem:[%s6] sm:$0xf]
        %v1313 = vld [vmem:[%s6 + $0x4] sm:$0xf]
        %v1314 = vld [vmem:[%s6 + $0x8] sm:$0xf]
        %v1315 = vld [vmem:[%s6 + $0xc] sm:$0xf]
        %v1316 = vld [vmem:[%s6 + $0x10] sm:$0xf]
        %v1317 = vld [vmem:[%s6 + $0x14] sm:$0xf]
        %v1318 = vld [vmem:[%s6 + $0x18] sm:$0xf]
        %v1319 = vld [vmem:[%s6 + $0x1c] sm:$0xf]
        %v1320 = vld [vmem:[%s6 + $0x20] sm:$0xf]
        %v1321 = vld [vmem:[%s6 + $0x24] sm:$0xf]
        %v1322 = vld [vmem:[%s6 + $0x28] sm:$0xf]
        %v1323 = vld [vmem:[%s6 + $0x2c] sm:$0xf]
        %v1324 = vld [vmem:[%s6 + $0x30] sm:$0xf]
        %v1325 = vld [vmem:[%s6 + $0x34] sm:$0xf]
        %v1326 = vld [vmem:[%s6 + $0x38] sm:$0xf]
        %v1327 = vld [vmem:[%s6 + $0x3c] sm:$0xf]
        %v1328 = vld [vmem:[#allocation5 + $0x8] sm:$0x1]
        %v1330 = vlaneseq
        %v1331 = vshrl.u32 %v1330, 7
        %v1332 = vsub.s32 0, %v1331
        %v1333 = vrot.slane %v1328, %v1332
        %v1351 = vunpack.c.l.b16 %v1312
        %v1352 = vunpack.c.l.b16 %v1313
        %v1353 = vunpack.c.l.b16 %v1314
        %v1354 = vunpack.c.l.b16 %v1315
        %v1355 = vunpack.c.l.b16 %v1316
        %v1356 = vunpack.c.l.b16 %v1317
        %v1357 = vunpack.c.l.b16 %v1318
        %v1358 = vunpack.c.l.b16 %v1319
        %v1359 = vunpack.c.l.b16 %v1320
        %v1360 = vunpack.c.l.b16 %v1321
        %v1361 = vunpack.c.l.b16 %v1322
        %v1362 = vunpack.c.l.b16 %v1323
        %v1363 = vunpack.c.l.b16 %v1324
        %v1364 = vunpack.c.l.b16 %v1325
        %v1365 = vunpack.c.l.b16 %v1326
        %v1366 = vunpack.c.l.b16 %v1327
        %v1367 = vpack.c.b16 %v1352, %v1351
        %v1368 = vpack.c.b16 %v1354, %v1353
        %v1369 = vpack.c.b16 %v1356, %v1355
        %v1370 = vpack.c.b16 %v1358, %v1357
        %v1371 = vpack.c.b16 %v1360, %v1359
        %v1372 = vpack.c.b16 %v1362, %v1361
        %v1373 = vpack.c.b16 %v1364, %v1363
        %v1374 = vpack.c.b16 %v1366, %v1365
        %1383 = vmatprep.subr.bf16.mxu0 0
        %1384 = vmatpush1.bf16.msra.mxu0 %v1367
        %1385 = vmatprep.subr.bf16.mxu0 0
        %1386 = vmatpush1.bf16.msra.mxu0 %v1368
        %1387 = vmatprep.subr.bf16.mxu0 0
        %1388 = vmatpush1.bf16.msra.mxu0 %v1369
        %1389 = vmatprep.subr.bf16.mxu0 0
        %1390 = vmatpush1.bf16.msra.mxu0 %v1370
        %1391 = vmatprep.subr.bf16.mxu0 0
        %1392 = vmatpush1.bf16.msra.mxu0 %v1371
        %1393 = vmatprep.subr.bf16.mxu0 0
        %1394 = vmatpush1.bf16.msra.mxu0 %v1372
        %1395 = vmatprep.subr.bf16.mxu0 0
        %1396 = vmatpush1.bf16.msra.mxu0 %v1373
        %1397 = vmatprep.subr.bf16.mxu0 0
        %1398 = vmatpush1.bf16.msra.mxu0 %v1374
        %1399 = vmatprep.subr.bf16.mxu0 0
        %1400 = vmatpush1.bf16.msra.mxu0 0
        %1401 = vmatprep.subr.bf16.mxu0 0
        %1402 = vmatpush1.bf16.msra.mxu0 0
        %1403 = vmatprep.subr.bf16.mxu0 0
        %1404 = vmatpush1.bf16.msra.mxu0 0
        %1405 = vmatprep.subr.bf16.mxu0 0
        %1406 = vmatpush1.bf16.msra.mxu0 0
        %1407 = vmatprep.subr.bf16.mxu0 0
        %1408 = vmatpush1.bf16.msra.mxu0 0
        %1409 = vmatprep.subr.bf16.mxu0 0
        %1410 = vmatpush1.bf16.msra.mxu0 0
        %1411 = vmatprep.subr.bf16.mxu0 0
        %1412 = vmatpush1.bf16.msra.mxu0 0
        %1413 = vmatprep.subr.bf16.mxu0 0
        %1414 = vmatpush1.bf16.msra.mxu0 0
        %1415 = vmatprep.mubr.bf16.mxu0 0
        %1416 = vmatmul.mubr.bf16.gmra.mrb[0].mxu0 %v1311
        %v1417 = vpop.f32.mrb[0].mxu0
        %v1418 = vadd.f32 %v1333, %v1417
        %v1419 = vpop.f32.mrb[0].mxu0
        %v1420 = vpop.f32.mrb[0].mxu0
        %v1421 = vpop.f32.mrb[0].mxu0
        %1422 = vdwg.mxu0
        %v1423 = vtanh.pop %v1418
        %1424 = vst [vmem:[%s344] sm:$0xff] %v1423
        %s1425 = sand.u32 %s186, 1
        %s1426 = scalar_lea.sflag [#allocation4], %s1425
        %s1427 = sand.u32 %s186, 1
        %s1428 = smul.addr %s1427, 8
        %s1429 = scalar_lea.vmem [#allocation7], %s1428
        // Predicated region
        $region61: #{lstm_forward_seq.3} parent=47 // pred_check
          %p1430 = pneg %p196
        $region62: #{lstm_forward_seq.3} parent=47 // pred_check_branch
          %1432 = sbr.rel (%p1430) target = $region64
        $region63: #{lstm_forward_seq.3} parent=47 // pred_region
          %s1434 = ssub.s32 128, 128
          %1435 = vsyncadd %s1426, %s1434
          %s1436 = smul.addr %s26, 128
          %s1437 = scalar_lea.hbm %s7, %s1436
          %s1439 = sshll.u32 %s1429, 4
          %s1440 = int_to_ptr.vmem [resolvable:$true] %s1439
          %1442 = dma.vmem_to_hbm [thread:$0]  %s1440, 128, %s1437, %s1426
        $region64: #{lstm_forward_seq.3} parent=47 // pred_fallthru
          _
        // Predicated region
        $region65: #{lstm_forward_seq.3} parent=47 // pred_check
          %p1443 = pneg %p217
        $region66: #{lstm_forward_seq.3} parent=47 // pred_check_branch
          %1445 = sbr.rel (%p1443) target = $region68
        $region67: #{lstm_forward_seq.3} parent=47 // pred_region
          _
        $region68: #{lstm_forward_seq.3} parent=47 // pred_fallthru
          _
        // Predicated region
        $region69: #{lstm_forward_seq.3} parent=47 // pred_check
          %p1446 = pneg %p238
        $region70: #{lstm_forward_seq.3} parent=47 // pred_check_branch
          %1448 = sbr.rel (%p1446) target = $region72
        $region71: #{lstm_forward_seq.3} parent=47 // pred_region
          _
        $region72: #{lstm_forward_seq.3} parent=47 // pred_fallthru
          _
        // Predicated region
        $region73: #{lstm_forward_seq.3} parent=47 // pred_check
          %p1449 = pneg %p217
        $region74: #{lstm_forward_seq.3} parent=47 // pred_check_branch
          %1451 = sbr.rel (%p1449) target = $region76
        $region75: #{lstm_forward_seq.3} parent=47 // pred_region
          _
        $region76: #{lstm_forward_seq.3} parent=47 // pred_fallthru
          _
        // Predicated region
        $region77: #{lstm_forward_seq.3} parent=47 // pred_check
          %p1452 = pneg %p238
        $region78: #{lstm_forward_seq.3} parent=47 // pred_check_branch
          %1454 = sbr.rel (%p1452) target = $region80
        $region79: #{lstm_forward_seq.3} parent=47 // pred_region
          _
        $region80: #{lstm_forward_seq.3} parent=47 // pred_fallthru
          _
      $region48: #{lstm_forward_seq.3} parent=5 // pred_fallthru
        _
      %p1455 = scmp.le.s32.totalorder 2, %s21
      // Predicated region
      $region81: #{lstm_forward_seq.3} parent=5 // pred_check
        %p1456 = pneg %p1455
      $region82: #{lstm_forward_seq.3} parent=5 // pred_check_branch
        %1458 = sbr.rel (%p1456) target = $region84
      $region83: #{lstm_forward_seq.3} parent=5 // pred_region
        %s1459 = ssub.s32 %s21, 2
        // Predicated region
        $region85: #{lstm_forward_seq.3} parent=83 // pred_check
          %p1460 = pneg %p202
        $region86: #{lstm_forward_seq.3} parent=83 // pred_check_branch
          %1462 = sbr.rel (%p1460) target = $region88
        $region87: #{lstm_forward_seq.3} parent=83 // pred_region
          %s1463 = sand.u32 %s187, 1
          %s1464 = scalar_lea.sflag [#allocation4], %s1463
          %s1465 = sand.u32 %s187, 1
          %s1466 = smul.addr %s1465, 8
          %s1467 = scalar_lea.vmem [#allocation7], %s1466
          %1468 = dma.done %s1464, 128
        $region88: #{lstm_forward_seq.3} parent=83 // pred_fallthru
          _
      $region84: #{lstm_forward_seq.3} parent=5 // pred_fallthru
        _
    $region6: #{lstm_forward_seq.3} parent=1 // loop_footer
      %s25 = sadd.s32 1, %s21
    $region7: #{lstm_forward_seq.3} parent=1 // loop_footer_branch
      %20 = sbr.rel target = $region3
    $region8: #{lstm_forward_seq.3} parent=1 // loop_exit
      _
    %1469 = vsyncpa [#allocation3], 1
    %s1470 = scalar_lea.sflag [#allocation3], 1
    %1471 = vsyncpa %s1470, 1
    %1472 = vsyncpa [#allocation6], 1
    %1473 = vsyncpa [#allocation4], 1
    %s1474 = scalar_lea.sflag [#allocation4], 1
    %1475 = vsyncpa %s1474, 1

</llo_original>
